<compile_context>
chip_gen: v6e
topology: v6e:2x2x1
jax: 0.10.0
libtpu: 0.0.40
codegen_flags: <defaults>
</compile_context>

<pallas_src>
import jax
import jax.numpy as jnp
from jax.experimental import pallas as pl
from jax.experimental.pallas import tpu as pltpu


# --------------------- Kernel 1: decoder (attention) + dense + tanh ----------
def _hidden_kernel(tgt_ref, mem_ref, wd_ref, bd_ref, hid_f32_ref, hid_bf16_ref):
    tgt = tgt_ref[...]            # (bb, T, H) bf16
    mem = mem_ref[...]            # (bb, S, H) bf16
    bb, t, h = tgt.shape
    scale = 1.0 / jnp.sqrt(jnp.float32(h))

    # scores = tgt @ mem^T (batched), contracting the last dims of both
    # operands on the MXU (no explicit transpose of `mem` is materialized).
    scores = jnp.einsum("bth,bsh->bts", tgt, mem,
                        preferred_element_type=jnp.float32) * scale  # (bb,T,S) f32

    m = jnp.max(scores, axis=-1, keepdims=True)
    p = jnp.exp(scores - m)
    denom = jnp.sum(p, axis=-1, keepdims=True)
    # Approx reciprocal runs on the EUP (free slot); ~1e-3 relative error,
    # acceptable for an LM head and covered by the test tolerance.
    attn = p * pl.reciprocal(denom, approx=True)                      # (bb,T,S) f32

    out = jnp.einsum("bts,bsh->bth", attn.astype(jnp.bfloat16), mem,
                     preferred_element_type=jnp.float32)              # (bb,T,H) f32

    # Flatten bb batch rows so the dense matmul presents M = bb*T (=256 with
    # the defaults) to the 256-wide MXU on v6e/v7x.
    out2 = out.reshape(bb * t, h).astype(jnp.bfloat16)
    hidden = jnp.tanh(
        jnp.dot(out2, wd_ref[...], preferred_element_type=jnp.float32)
        + bd_ref[0, :])                                               # (bb*T,H) f32
    hidden = hidden.reshape(bb, t, h)

    hid_f32_ref[...] = hidden
    hid_bf16_ref[...] = hidden.astype(jnp.bfloat16)


# --------------------- Kernel 2: LM head (hidden @ W_lm + b) ------------------
def _lm_head_kernel(hid_ref, wl_ref, bl_ref, logits_ref):
    logits = (jnp.dot(hid_ref[...], wl_ref[...],
                      preferred_element_type=jnp.float32)
              + bl_ref[0, :])                                         # (tm, tv) f32
    logits_ref[...] = logits.astype(logits_ref.dtype)


def _lm_footprint_bytes(tm, tv, h):
    # double-buffered inputs + double-buffered f32 output tile
    return 2 * (tm * h * 2 + h * tv * 2 + tv * 4) + 2 * (tm * tv * 4)


def graph_coder_generator_forward(tgt, memory, w_dense, b_dense, w_lm, b_lm,
                                  *, tv=2048, tm=256,
                                  lm_vmem_budget_bytes=48 * 1024 * 1024):
    """Fused decoder -> tanh(dense) -> lm_head. Returns (logits, hidden_states)."""
    B, T, H = tgt.shape
    _, S, _ = memory.shape
    V = w_lm.shape[1]
    BT = B * T

    # ---- tile selection -------------------------------------------------------
    # Vocab tile: as large as V / the VMEM budget allow, multiple of 128.
    tv = min(tv, V)
    while V % tv != 0:
        tv //= 2
    # Row tile for the LM head: 256 fills the v6e/v7x MXU; must divide B*T.
    tm = min(tm, BT)
    while BT % tm != 0:
        tm //= 2
    assert tm % 8 == 0, "row tile must be sublane aligned"
    assert (tv % 128 == 0) or tv == V, "vocab tile must be lane aligned"
    # v7x has 64 MiB VMEM: shrink tv until the double-buffered footprint fits
    # a conservative budget (v5e/v6e have 128 MiB and are unaffected).
    while (_lm_footprint_bytes(tm, tv, H) > lm_vmem_budget_bytes
           and tv > 128 and V % (tv // 2) == 0):
        tv //= 2

    # Batch block for the hidden kernel (M = bb*T = 256 with defaults).
    bb = 2 if B % 2 == 0 else 1

    # ---- operand precision ----------------------------------------------------
    tgt_bf = tgt.astype(jnp.bfloat16)
    mem_bf = memory.astype(jnp.bfloat16)
    wd_bf = w_dense.astype(jnp.bfloat16)
    wl_bf = w_lm.astype(jnp.bfloat16)
    bd = b_dense.reshape(1, H).astype(jnp.float32)
    bl = b_lm.reshape(1, V).astype(jnp.float32)

    # ---- call 1: attention + dense + tanh -------------------------------------
    hid_in_bytes = bb * T * H * 2 + bb * S * H * 2 + H * H * 2 + H * 4
    hid_out_bytes = bb * T * H * 4 + bb * T * H * 2
    hid_live_bytes = 3 * bb * T * S * 4 + 2 * bb * T * H * 4
    hid_vmem_limit = int(min(max(2 * (hid_in_bytes + hid_out_bytes)
                                 + hid_live_bytes + (2 << 20), 32 << 20),
                             64 << 20))

    hidden_f32, hidden_bf16 = pl.pallas_call(
        _hidden_kernel,
        out_shape=(
            jax.ShapeDtypeStruct((B, T, H), jnp.float32),    # hidden_states (returned)
            jax.ShapeDtypeStruct((B, T, H), jnp.bfloat16),   # LM-head input
        ),
        grid_spec=pltpu.PrefetchScalarGridSpec(
            num_scalar_prefetch=0,
            grid=(B // bb,),
            in_specs=[
                pl.BlockSpec((bb, T, H), lambda i: (i, 0, 0)),   # tgt (bf16)
                pl.BlockSpec((bb, S, H), lambda i: (i, 0, 0)),   # memory (bf16)
                pl.BlockSpec((H, H), lambda i: (0, 0)),          # dense W (bf16)
                pl.BlockSpec((1, H), lambda i: (0, 0)),          # dense b (f32)
            ],
            out_specs=[
                pl.BlockSpec((bb, T, H), lambda i: (i, 0, 0)),
                pl.BlockSpec((bb, T, H), lambda i: (i, 0, 0)),
            ],
        ),
        compiler_params=pltpu.CompilerParams(
            dimension_semantics=("parallel",),
            vmem_limit_bytes=hid_vmem_limit,
        ),
        cost_estimate=pl.CostEstimate(
            flops=2 * B * T * (2 * S * H + H * H),
            transcendentals=B * T * (S + H),
            bytes_accessed=2 * (B * T * H + B * S * H + H * H) + 4 * H
                           + 4 * B * T * H + 2 * B * T * H,
        ),
    )(tgt_bf, mem_bf, wd_bf, bd)

    # ---- call 2: LM head over flattened rows -----------------------------------
    # Grid = (vocab tiles OUTER, row tiles INNER): the W_lm block index depends
    # only on the vocab axis, so each (H, tv) weight tile is DMA'd once and
    # reused across all B*T rows -> W_lm streams from HBM exactly once.
    hid_flat = hidden_bf16.reshape(BT, H)
    lm_vmem_limit = int(min(max(_lm_footprint_bytes(tm, tv, H) + (2 << 20),
                                32 << 20), 64 << 20))

    logits_flat = pl.pallas_call(
        _lm_head_kernel,
        out_shape=jax.ShapeDtypeStruct((BT, V), jnp.float32),
        grid_spec=pltpu.PrefetchScalarGridSpec(
            num_scalar_prefetch=0,
            grid=(V // tv, BT // tm),
            in_specs=[
                pl.BlockSpec((tm, H), lambda v, m: (m, 0)),    # hidden rows (bf16)
                pl.BlockSpec((H, tv), lambda v, m: (0, v)),    # lm W tile (bf16)
                pl.BlockSpec((1, tv), lambda v, m: (0, v)),    # lm b tile (f32)
            ],
            out_specs=pl.BlockSpec((tm, tv), lambda v, m: (m, v)),
        ),
        compiler_params=pltpu.CompilerParams(
            dimension_semantics=("parallel", "parallel"),
            vmem_limit_bytes=lm_vmem_limit,
        ),
        cost_estimate=pl.CostEstimate(
            flops=2 * BT * H * V,
            transcendentals=0,
            bytes_accessed=2 * BT * H * (V // tv)   # hidden re-read per vocab tile
                           + 2 * H * V + 4 * V      # weight once + bias
                           + 4 * BT * V,            # f32 logits write
        ),
    )(hid_flat, wl_bf, bl)

    logits = logits_flat.reshape(B, T, V)
    return logits, hidden_f32


def _reference_forward(tgt, memory, w_dense, b_dense, w_lm, b_lm):
    H = tgt.shape[-1]
    scores = jnp.einsum("bth,bsh->bts", tgt, memory) / jnp.sqrt(jnp.float32(H))
    attn = jax.nn.softmax(scores, axis=-1)
    out = jnp.einsum("bts,bsh->bth", attn, memory)
    hidden = jnp.tanh(out @ w_dense + b_dense)
    logits = hidden @ w_lm + b_lm
    return logits, hidden


if __name__ == "__main__":
    # Small but lane-dense / MXU-friendly shapes (H, V multiples of 128).
    B, T, S, H, V = 2, 128, 128, 128, 512

    key = jax.random.PRNGKey(0)
    k_tgt, k_mem, k_wd, k_bd, k_wl, k_bl = jax.random.split(key, 6)

    tgt = jax.random.normal(k_tgt, (B, T, H), dtype=jnp.float32)
    memory = jax.random.normal(k_mem, (B, S, H), dtype=jnp.float32)

    # Deterministic nn.Linear-style init (uniform(-1/sqrt(fan_in), 1/sqrt(fan_in))).
    bound_d = 1.0 / (H ** 0.5)
    w_dense = jax.random.uniform(k_wd, (H, H), jnp.float32, -bound_d, bound_d)
    b_dense = jax.random.uniform(k_bd, (H,), jnp.float32, -bound_d, bound_d)
    w_lm = jax.random.uniform(k_wl, (H, V), jnp.float32, -bound_d, bound_d)
    b_lm = jax.random.uniform(k_bl, (V,), jnp.float32, -bound_d, bound_d)

    logits, hidden = graph_coder_generator_forward(
        tgt, memory, w_dense, b_dense, w_lm, b_lm)
    jax.block_until_ready((logits, hidden))

    ref_logits, ref_hidden = _reference_forward(
        tgt, memory, w_dense, b_dense, w_lm, b_lm)

    # bf16 matmul operands + approx reciprocal -> looser tolerance than f32.
    assert jnp.allclose(hidden, ref_hidden, atol=3e-2, rtol=3e-2), (
        float(jnp.max(jnp.abs(hidden - ref_hidden))))
    assert jnp.allclose(logits, ref_logits, atol=3e-2, rtol=3e-2), (
        float(jnp.max(jnp.abs(logits - ref_logits))))

    print("KERNEL_OK")
</pallas_src>

<mosaic_0001>
module attributes {stable_mosaic.version = 11 : i64} {
  func.func @_hidden_kernel(%arg0: i32, %arg1: memref<2x128x128xbf16, #tpu.memory_space<vmem>>, %arg2: memref<2x128x128xbf16, #tpu.memory_space<vmem>>, %arg3: memref<128x128xbf16, #tpu.memory_space<vmem>>, %arg4: memref<1x128xf32, #tpu.memory_space<vmem>>, %arg5: memref<2x128x128xf32, #tpu.memory_space<vmem>>, %arg6: memref<2x128x128xbf16, #tpu.memory_space<vmem>>) attributes {dimension_semantics = [#tpu.dimension_semantics<parallel>], iteration_bounds = array<i64: 1>, scalar_prefetch = 0 : i64, scratch_operands = 0 : i64, tpu.core_type = #tpu.core_type<tc>, window_params = [{transform_indices = @transform_0, window_bounds = array<i64: 2, 128, 128>}, {transform_indices = @transform_1, window_bounds = array<i64: 2, 128, 128>}, {pipeline_mode = #tpu.pipeline_mode<synchronous>, transform_indices = @transform_2, window_bounds = array<i64: 128, 128>}, {pipeline_mode = #tpu.pipeline_mode<synchronous>, transform_indices = @transform_3, window_bounds = array<i64: 1, 128>}, {transform_indices = @transform_4, window_bounds = array<i64: 2, 128, 128>}, {transform_indices = @transform_5, window_bounds = array<i64: 2, 128, 128>}]} {
    %c0 = arith.constant 0 : index
    %c0_0 = arith.constant 0 : index
    %c0_1 = arith.constant 0 : index
    %0 = vector.load %arg1[%c0, %c0_0, %c0_1] : memref<2x128x128xbf16, #tpu.memory_space<vmem>>, vector<2x128x128xbf16>
    %c0_2 = arith.constant 0 : index
    %c0_3 = arith.constant 0 : index
    %c0_4 = arith.constant 0 : index
    %1 = vector.load %arg2[%c0_2, %c0_3, %c0_4] : memref<2x128x128xbf16, #tpu.memory_space<vmem>>, vector<2x128x128xbf16>
    %cst = arith.constant 1.280000e+02 : f32
    %2 = math.sqrt %cst : f32
    %cst_5 = arith.constant 1.000000e+00 : f32
    %3 = arith.divf %cst_5, %2 : f32
    "tpu.trace_start"() <{level = 10 : i32, message = "bth,bsh->bts"}> : () -> ()
    %cst_6 = arith.constant dense<0.000000e+00> : vector<2x128x128xf32>
    %4 = tpu.matmul %0, %1, %cst_6 {dimension_numbers = #tpu.dot_dimension_numbers<[2], [2], [1], [1], [0, 0, 0, 1, 1, 1], [0], [0]>} : vector<2x128x128xbf16>, vector<2x128x128xbf16>, vector<2x128x128xf32> -> vector<2x128x128xf32>
    "tpu.trace_stop"() : () -> ()
    %5 = vector.broadcast %3 : f32 to vector<2x128x128xf32>
    %6 = arith.mulf %4, %5 : vector<2x128x128xf32>
    %cst_7 = arith.constant dense<0xFF800000> : vector<2x128xf32>
    %7 = vector.multi_reduction <maximumf>, %6, %cst_7 [2] : vector<2x128x128xf32> to vector<2x128xf32>
    %8 = vector.shape_cast %7 : vector<2x128xf32> to vector<2x128x1xf32>
    %9 = vector.broadcast %8 : vector<2x128x1xf32> to vector<2x128x128xf32>
    %10 = arith.subf %6, %9 : vector<2x128x128xf32>
    %11 = math.exp %10 : vector<2x128x128xf32>
    %cst_8 = arith.constant dense<0.000000e+00> : vector<2x128xf32>
    %12 = vector.multi_reduction <add>, %11, %cst_8 [2] : vector<2x128x128xf32> to vector<2x128xf32>
    %13 = vector.shape_cast %12 : vector<2x128xf32> to vector<2x128x1xf32>
    %14 = tpu.reciprocal %13 {approx = true} : vector<2x128x1xf32> -> vector<2x128x1xf32>
    %15 = vector.broadcast %14 : vector<2x128x1xf32> to vector<2x128x128xf32>
    %16 = arith.mulf %11, %15 : vector<2x128x128xf32>
    %17 = arith.truncf %16 : vector<2x128x128xf32> to vector<2x128x128xbf16>
    "tpu.trace_start"() <{level = 10 : i32, message = "bts,bsh->bth"}> : () -> ()
    %cst_9 = arith.constant dense<0.000000e+00> : vector<2x128x128xf32>
    %18 = tpu.matmul %17, %1, %cst_9 {dimension_numbers = #tpu.dot_dimension_numbers<[2], [1], [1], [2], [0, 0, 0, 1, 1, 2], [0], [0]>} : vector<2x128x128xbf16>, vector<2x128x128xbf16>, vector<2x128x128xf32> -> vector<2x128x128xf32>
    "tpu.trace_stop"() : () -> ()
    %19 = vector.shape_cast %18 : vector<2x128x128xf32> to vector<256x128xf32>
    %20 = arith.truncf %19 : vector<256x128xf32> to vector<256x128xbf16>
    %c0_10 = arith.constant 0 : index
    %c0_11 = arith.constant 0 : index
    %21 = vector.load %arg3[%c0_10, %c0_11] : memref<128x128xbf16, #tpu.memory_space<vmem>>, vector<128x128xbf16>
    %cst_12 = arith.constant dense<0.000000e+00> : vector<256x128xf32>
    %22 = tpu.matmul %20, %21, %cst_12 {dimension_numbers = #tpu.dot_dimension_numbers<[1], [0], [0], [1], [0, 0, 1, 1], [], []>} : vector<256x128xbf16>, vector<128x128xbf16>, vector<256x128xf32> -> vector<256x128xf32>
    %c0_13 = arith.constant 0 : index
    %c0_14 = arith.constant 0 : index
    %23 = vector.load %arg4[%c0_13, %c0_14] : memref<1x128xf32, #tpu.memory_space<vmem>>, vector<1x128xf32>
    %24 = vector.shape_cast %23 : vector<1x128xf32> to vector<128xf32>
    %25 = vector.shape_cast %24 : vector<128xf32> to vector<1x128xf32>
    %26 = vector.broadcast %25 : vector<1x128xf32> to vector<256x128xf32>
    %27 = arith.addf %22, %26 : vector<256x128xf32>
    %28 = math.tanh %27 : vector<256x128xf32>
    %29 = vector.shape_cast %28 : vector<256x128xf32> to vector<2x128x128xf32>
    %c0_15 = arith.constant 0 : index
    %c0_16 = arith.constant 0 : index
    %c0_17 = arith.constant 0 : index
    %30 = vector.load %arg5[%c0_15, %c0_16, %c0_17] : memref<2x128x128xf32, #tpu.memory_space<vmem>>, vector<2x128x128xf32>
    tpu.vector_store %arg5[%c0_15, %c0_16, %c0_17], %29 {strides = array<i32>} : memref<2x128x128xf32, #tpu.memory_space<vmem>>, vector<2x128x128xf32>,
    %31 = arith.truncf %29 : vector<2x128x128xf32> to vector<2x128x128xbf16>
    %c0_18 = arith.constant 0 : index
    %c0_19 = arith.constant 0 : index
    %c0_20 = arith.constant 0 : index
    %32 = vector.load %arg6[%c0_18, %c0_19, %c0_20] : memref<2x128x128xbf16, #tpu.memory_space<vmem>>, vector<2x128x128xbf16>
    tpu.vector_store %arg6[%c0_18, %c0_19, %c0_20], %31 {strides = array<i32>} : memref<2x128x128xbf16, #tpu.memory_space<vmem>>, vector<2x128x128xbf16>,
    return
  }
  func.func @transform_0(%arg0: i32) -> (i32, i32, i32) {
    %c0_i32 = arith.constant 0 : i32
    %c0_i32_0 = arith.constant 0 : i32
    %c0_i32_1 = arith.constant 0 : i32
    return %arg0, %c0_i32, %c0_i32_0 : i32, i32, i32
  }
  func.func @transform_1(%arg0: i32) -> (i32, i32, i32) {
    %c0_i32 = arith.constant 0 : i32
    %c0_i32_0 = arith.constant 0 : i32
    %c0_i32_1 = arith.constant 0 : i32
    return %arg0, %c0_i32, %c0_i32_0 : i32, i32, i32
  }
  func.func @transform_2(%arg0: i32) -> (i32, i32) {
    %c0_i32 = arith.constant 0 : i32
    %c0_i32_0 = arith.constant 0 : i32
    %c0_i32_1 = arith.constant 0 : i32
    return %c0_i32, %c0_i32_0 : i32, i32
  }
  func.func @transform_3(%arg0: i32) -> (i32, i32) {
    %c0_i32 = arith.constant 0 : i32
    %c0_i32_0 = arith.constant 0 : i32
    %c0_i32_1 = arith.constant 0 : i32
    return %c0_i32, %c0_i32_0 : i32, i32
  }
  func.func @transform_4(%arg0: i32) -> (i32, i32, i32) {
    %c0_i32 = arith.constant 0 : i32
    %c0_i32_0 = arith.constant 0 : i32
    %c0_i32_1 = arith.constant 0 : i32
    return %arg0, %c0_i32, %c0_i32_0 : i32, i32, i32
  }
  func.func @transform_5(%arg0: i32) -> (i32, i32, i32) {
    %c0_i32 = arith.constant 0 : i32
    %c0_i32_0 = arith.constant 0 : i32
    %c0_i32_1 = arith.constant 0 : i32
    return %arg0, %c0_i32, %c0_i32_0 : i32, i32, i32
  }
}

</mosaic_0001>

<llo_original>
// kernel: tpu_custom_call.1
$region0: #{tpu_custom_call.1}
  #allocation0 [shape = 'u32[]', space=smem, size = 0x4, offset = 0x4, fixed_abs, tag = 'smem constant byte address 0x4 - core index']
  #allocation1 [shape = 'u32[144,128]{1,0:T(1,128)}', space=vmem, size = 0x12000, scoped, tag = 'internal scratch']
  %s0 = inlined_call_operand.hbm [shape: bf16[2,128,128], index: 0, kind: input, shape index: {}]
  %s1 = inlined_call_operand.hbm [shape: bf16[2,128,128], index: 1, kind: input, shape index: {}]
  %s2 = inlined_call_operand.hbm [shape: bf16[128,128], index: 2, kind: input, shape index: {}]
  %s3 = inlined_call_operand.vmem [shape: f32[1,128], index: 3, kind: input, shape index: {}]
  %s4 = inlined_call_operand.hbm [shape: f32[2,128,128], index: 4, kind: output, shape index: {0}]
  %s5 = inlined_call_operand.hbm [shape: bf16[2,128,128], index: 5, kind: output, shape index: {1}]
  %6 = xla_tuple %s4, %s5
  %s7 = sld [smem:[#allocation0]]
  $region46: #{tpu_custom_call.1} parent=0
    _
  %s9 = ssub.s32 1, %s7
  %s10 = scalar_select 0, %s9, %s7
  $region1: #{tpu_custom_call.1} parent=0
    #allocation2 [shape = 'u8[65536]{0}', space=vmem, size = 0x10000, scoped, tag = 'input window, operand 0, single buffered']
    #allocation3 [shape = 's32[1]{0}', space=sflag, size = 0x4, scoped, tag = 'scoped memory for tpu_custom_call.1']
    #allocation4 [shape = 's32[1]{0}', space=sflag, size = 0x4, scoped, tag = 'scoped memory for tpu_custom_call.1']
    #allocation5 [shape = 'u8[65536]{0}', space=vmem, size = 0x10000, scoped, tag = 'input window, operand 1, single buffered']
    #allocation6 [shape = 's32[1]{0}', space=sflag, size = 0x4, scoped, tag = 'scoped memory for tpu_custom_call.1']
    #allocation7 [shape = 'u8[32768]{0}', space=vmem, size = 0x8000, scoped, tag = 'input window, operand 2, single buffered']
    #allocation8 [shape = 'u8[131072]{0}', space=vmem, size = 0x20000, scoped, tag = 'output window, operand 0, single buffered']
    #allocation9 [shape = 'u8[65536]{0}', space=vmem, size = 0x10000, scoped, tag = 'output window, operand 1, single buffered']
    #allocation10 [shape = 's32[1]{0}', space=sflag, size = 0x4, scoped, tag = 'scoped memory for tpu_custom_call.1']
    %11 = vsyncpa [#allocation3], 0
    %12 = vsyncpa [#allocation6], 0
    %13 = vsyncpa [#allocation4], 0
    %14 = vsyncpa [#allocation10], 0
    // Predicated region
    $region2: #{tpu_custom_call.1} parent=1 // pred_check
      _
    $region3: #{tpu_custom_call.1} parent=1 // pred_check_branch
      %16 = sbr.rel (0) target = $region5
    $region4: #{tpu_custom_call.1} parent=1 // pred_region
      %s18 = ssub.s32 2048, 2048
      %19 = vsyncadd [#allocation3], %s18
      %s20 = sshll.u32 [#allocation2], 4
      %s21 = int_to_ptr.vmem [resolvable:$true] %s20
      %26 = dma.hbm_to_vmem [thread:$0]  %s0, 2048, %s21, [#allocation3], 64, 64, 4
    $region5: #{tpu_custom_call.1} parent=1 // pred_fallthru
      _
    // Predicated region
    $region6: #{tpu_custom_call.1} parent=1 // pred_check
      _
    $region7: #{tpu_custom_call.1} parent=1 // pred_check_branch
      %28 = sbr.rel (0) target = $region9
    $region8: #{tpu_custom_call.1} parent=1 // pred_region
      %s30 = ssub.s32 2048, 2048
      %31 = vsyncadd [#allocation6], %s30
      %s32 = sshll.u32 [#allocation5], 4
      %s33 = int_to_ptr.vmem [resolvable:$true] %s32
      %38 = dma.hbm_to_vmem [thread:$0]  %s1, 2048, %s33, [#allocation6], 64, 64, 4
    $region9: #{tpu_custom_call.1} parent=1 // pred_fallthru
      _
    // Predicated region
    $region10: #{tpu_custom_call.1} parent=1 // pred_check
      _
    $region11: #{tpu_custom_call.1} parent=1 // pred_check_branch
      %40 = sbr.rel (0) target = $region13
    $region12: #{tpu_custom_call.1} parent=1 // pred_region
      %s42 = ssub.s32 1024, 1024
      %43 = vsyncadd [#allocation6], %s42
      %s44 = sshll.u32 [#allocation7], 4
      %s45 = int_to_ptr.vmem [resolvable:$true] %s44
      %50 = dma.hbm_to_vmem [thread:$0]  %s2, 1024, %s45, [#allocation6], 64, 64, 4
    $region13: #{tpu_custom_call.1} parent=1 // pred_fallthru
      _
    // Predicated region
    $region14: #{tpu_custom_call.1} parent=1 // pred_check
      _
    $region15: #{tpu_custom_call.1} parent=1 // pred_check_branch
      %52 = sbr.rel (0) target = $region17
    $region16: #{tpu_custom_call.1} parent=1 // pred_region
      _
    $region17: #{tpu_custom_call.1} parent=1 // pred_fallthru
      _
    // Predicated region
    $region18: #{tpu_custom_call.1} parent=1 // pred_check
      _
    $region19: #{tpu_custom_call.1} parent=1 // pred_check_branch
      %54 = sbr.rel (0) target = $region21
    $region20: #{tpu_custom_call.1} parent=1 // pred_region
      %55 = dma.done [#allocation3], 2048
    $region21: #{tpu_custom_call.1} parent=1 // pred_fallthru
      _
    // Predicated region
    $region22: #{tpu_custom_call.1} parent=1 // pred_check
      _
    $region23: #{tpu_custom_call.1} parent=1 // pred_check_branch
      %57 = sbr.rel (0) target = $region25
    $region24: #{tpu_custom_call.1} parent=1 // pred_region
      %58 = dma.done [#allocation6], 2048
    $region25: #{tpu_custom_call.1} parent=1 // pred_fallthru
      _
    // Predicated region
    $region26: #{tpu_custom_call.1} parent=1 // pred_check
      _
    $region27: #{tpu_custom_call.1} parent=1 // pred_check_branch
      %60 = sbr.rel (0) target = $region29
    $region28: #{tpu_custom_call.1} parent=1 // pred_region
      %61 = dma.done [#allocation6], 1024
    $region29: #{tpu_custom_call.1} parent=1 // pred_fallthru
      _
    %v63 = vld [vmem:[#allocation2] sm:$0xf]
    %v64 = vld [vmem:[#allocation2 + $0x4] sm:$0xf]
    %v65 = vld [vmem:[#allocation2 + $0x8] sm:$0xf]
    %v66 = vld [vmem:[#allocation2 + $0xc] sm:$0xf]
    %v67 = vld [vmem:[#allocation2 + $0x10] sm:$0xf]
    %v68 = vld [vmem:[#allocation2 + $0x14] sm:$0xf]
    %v69 = vld [vmem:[#allocation2 + $0x18] sm:$0xf]
    %v70 = vld [vmem:[#allocation2 + $0x1c] sm:$0xf]
    %v71 = vld [vmem:[#allocation2 + $0x20] sm:$0xf]
    %v72 = vld [vmem:[#allocation2 + $0x24] sm:$0xf]
    %v73 = vld [vmem:[#allocation2 + $0x28] sm:$0xf]
    %v74 = vld [vmem:[#allocation2 + $0x2c] sm:$0xf]
    %v75 = vld [vmem:[#allocation2 + $0x30] sm:$0xf]
    %v76 = vld [vmem:[#allocation2 + $0x34] sm:$0xf]
    %v77 = vld [vmem:[#allocation2 + $0x38] sm:$0xf]
    %v78 = vld [vmem:[#allocation2 + $0x3c] sm:$0xf]
    %v79 = vld [vmem:[#allocation2 + $0x40] sm:$0xf]
    %v80 = vld [vmem:[#allocation2 + $0x44] sm:$0xf]
    %v81 = vld [vmem:[#allocation2 + $0x48] sm:$0xf]
    %v82 = vld [vmem:[#allocation2 + $0x4c] sm:$0xf]
    %v83 = vld [vmem:[#allocation2 + $0x50] sm:$0xf]
    %v84 = vld [vmem:[#allocation2 + $0x54] sm:$0xf]
    %v85 = vld [vmem:[#allocation2 + $0x58] sm:$0xf]
    %v86 = vld [vmem:[#allocation2 + $0x5c] sm:$0xf]
    %v87 = vld [vmem:[#allocation2 + $0x60] sm:$0xf]
    %v88 = vld [vmem:[#allocation2 + $0x64] sm:$0xf]
    %v89 = vld [vmem:[#allocation2 + $0x68] sm:$0xf]
    %v90 = vld [vmem:[#allocation2 + $0x6c] sm:$0xf]
    %v91 = vld [vmem:[#allocation2 + $0x70] sm:$0xf]
    %v92 = vld [vmem:[#allocation2 + $0x74] sm:$0xf]
    %v93 = vld [vmem:[#allocation2 + $0x78] sm:$0xf]
    %v94 = vld [vmem:[#allocation2 + $0x7c] sm:$0xf]
    %v95 = vld [vmem:[#allocation5] sm:$0xf]
    %v96 = vld [vmem:[#allocation5 + $0x4] sm:$0xf]
    %v97 = vld [vmem:[#allocation5 + $0x8] sm:$0xf]
    %v98 = vld [vmem:[#allocation5 + $0xc] sm:$0xf]
    %v99 = vld [vmem:[#allocation5 + $0x10] sm:$0xf]
    %v100 = vld [vmem:[#allocation5 + $0x14] sm:$0xf]
    %v101 = vld [vmem:[#allocation5 + $0x18] sm:$0xf]
    %v102 = vld [vmem:[#allocation5 + $0x1c] sm:$0xf]
    %v103 = vld [vmem:[#allocation5 + $0x20] sm:$0xf]
    %v104 = vld [vmem:[#allocation5 + $0x24] sm:$0xf]
    %v105 = vld [vmem:[#allocation5 + $0x28] sm:$0xf]
    %v106 = vld [vmem:[#allocation5 + $0x2c] sm:$0xf]
    %v107 = vld [vmem:[#allocation5 + $0x30] sm:$0xf]
    %v108 = vld [vmem:[#allocation5 + $0x34] sm:$0xf]
    %v109 = vld [vmem:[#allocation5 + $0x38] sm:$0xf]
    %v110 = vld [vmem:[#allocation5 + $0x3c] sm:$0xf]
    %v111 = vld [vmem:[#allocation5 + $0x40] sm:$0xf]
    %v112 = vld [vmem:[#allocation5 + $0x44] sm:$0xf]
    %v113 = vld [vmem:[#allocation5 + $0x48] sm:$0xf]
    %v114 = vld [vmem:[#allocation5 + $0x4c] sm:$0xf]
    %v115 = vld [vmem:[#allocation5 + $0x50] sm:$0xf]
    %v116 = vld [vmem:[#allocation5 + $0x54] sm:$0xf]
    %v117 = vld [vmem:[#allocation5 + $0x58] sm:$0xf]
    %v118 = vld [vmem:[#allocation5 + $0x5c] sm:$0xf]
    %v119 = vld [vmem:[#allocation5 + $0x60] sm:$0xf]
    %v120 = vld [vmem:[#allocation5 + $0x64] sm:$0xf]
    %v121 = vld [vmem:[#allocation5 + $0x68] sm:$0xf]
    %v122 = vld [vmem:[#allocation5 + $0x6c] sm:$0xf]
    %v123 = vld [vmem:[#allocation5 + $0x70] sm:$0xf]
    %v124 = vld [vmem:[#allocation5 + $0x74] sm:$0xf]
    %v125 = vld [vmem:[#allocation5 + $0x78] sm:$0xf]
    %v126 = vld [vmem:[#allocation5 + $0x7c] sm:$0xf]
    %v143 = vunpack.c.l.b16 %v63
    %v144 = vunpack.c.l.b16 %v64
    %v145 = vunpack.c.l.b16 %v65
    %v146 = vunpack.c.l.b16 %v66
    %v147 = vunpack.c.l.b16 %v67
    %v148 = vunpack.c.l.b16 %v68
    %v149 = vunpack.c.l.b16 %v69
    %v150 = vunpack.c.l.b16 %v70
    %v151 = vunpack.c.l.b16 %v71
    %v152 = vunpack.c.l.b16 %v72
    %v153 = vunpack.c.l.b16 %v73
    %v154 = vunpack.c.l.b16 %v74
    %v155 = vunpack.c.l.b16 %v75
    %v156 = vunpack.c.l.b16 %v76
    %v157 = vunpack.c.l.b16 %v77
    %v158 = vunpack.c.l.b16 %v78
    %v159 = vpack.c.b16 %v144, %v143
    %v160 = vpack.c.b16 %v146, %v145
    %v161 = vpack.c.b16 %v148, %v147
    %v162 = vpack.c.b16 %v150, %v149
    %v163 = vpack.c.b16 %v152, %v151
    %v164 = vpack.c.b16 %v154, %v153
    %v165 = vpack.c.b16 %v156, %v155
    %v166 = vpack.c.b16 %v158, %v157
    %v191 = vunpack.c.l.b16 %v95
    %v192 = vunpack.c.l.b16 %v96
    %v193 = vunpack.c.l.b16 %v97
    %v194 = vunpack.c.l.b16 %v98
    %v195 = vunpack.c.l.b16 %v99
    %v196 = vunpack.c.l.b16 %v100
    %v197 = vunpack.c.l.b16 %v101
    %v198 = vunpack.c.l.b16 %v102
    %v199 = vunpack.c.l.b16 %v103
    %v200 = vunpack.c.l.b16 %v104
    %v201 = vunpack.c.l.b16 %v105
    %v202 = vunpack.c.l.b16 %v106
    %v203 = vunpack.c.l.b16 %v107
    %v204 = vunpack.c.l.b16 %v108
    %v205 = vunpack.c.l.b16 %v109
    %v206 = vunpack.c.l.b16 %v110
    %v207 = vpack.c.b16 %v192, %v191
    %v208 = vpack.c.b16 %v194, %v193
    %v209 = vpack.c.b16 %v196, %v195
    %v210 = vpack.c.b16 %v198, %v197
    %v211 = vpack.c.b16 %v200, %v199
    %v212 = vpack.c.b16 %v202, %v201
    %v213 = vpack.c.b16 %v204, %v203
    %v214 = vpack.c.b16 %v206, %v205
    %223 = vmatprep.subr.bf16.mxu0 0
    %224 = vmatpush1.bf16.xpose.msra.mxu0 %v214
    %225 = vmatprep.subr.bf16.mxu0 0
    %226 = vmatpush1.bf16.xpose.msra.mxu0 %v213
    %227 = vmatprep.subr.bf16.mxu0 0
    %228 = vmatpush1.bf16.xpose.msra.mxu0 %v212
    %229 = vmatprep.subr.bf16.mxu0 0
    %230 = vmatpush1.bf16.xpose.msra.mxu0 %v211
    %231 = vmatprep.subr.bf16.mxu0 0
    %232 = vmatpush1.bf16.xpose.msra.mxu0 %v210
    %233 = vmatprep.subr.bf16.mxu0 0
    %234 = vmatpush1.bf16.xpose.msra.mxu0 %v209
    %235 = vmatprep.subr.bf16.mxu0 0
    %236 = vmatpush1.bf16.xpose.msra.mxu0 %v208
    %237 = vmatprep.subr.bf16.mxu0 0
    %238 = vmatpush1.bf16.xpose.msra.mxu0 %v207
    %239 = vmatprep.subr.bf16.mxu0 0
    %240 = vmatpush2.bf16.xpose.msra.mxu0 0
    %241 = vmatprep.subr.bf16.mxu0 0
    %242 = vmatpush2.bf16.xpose.msra.mxu0 0
    %243 = vmatprep.subr.bf16.mxu0 0
    %244 = vmatpush2.bf16.xpose.msra.mxu0 0
    %245 = vmatprep.subr.bf16.mxu0 0
    %246 = vmatpush2.bf16.xpose.msra.mxu0 0
    %247 = vmatprep.subr.bf16.mxu0 0
    %248 = vmatpush2.bf16.xpose.msra.mxu0 0
    %249 = vmatprep.subr.bf16.mxu0 0
    %250 = vmatpush2.bf16.xpose.msra.mxu0 0
    %251 = vmatprep.subr.bf16.mxu0 0
    %252 = vmatpush2.bf16.xpose.msra.mxu0 0
    %253 = vmatprep.subr.bf16.mxu0 0
    %254 = vmatpush2.bf16.xpose.msra.mxu0 0
    %255 = vmatprep.mubr.bf16.mxu0 0
    %256 = vmatmul.mubr.bf16.gmra.mxu0 %v159
    %v257 = vpop.f32.mrf.mxu0
    %v258 = vadd.f32 0.0, %v257
    %v259 = vpop.f32.mrf.mxu0
    %v260 = vpop.f32.mrf.mxu0
    %v261 = vadd.f32 0.0, %v260
    %v262 = vpop.f32.mrf.mxu0
    %263 = vmatprep.mubr.bf16.mxu0 0
    %264 = vmatmul.mubr.bf16.gmra.mxu0 %v160
    %v265 = vpop.f32.mrf.mxu0
    %v266 = vadd.f32 0.0, %v265
    %v267 = vpop.f32.mrf.mxu0
    %v268 = vpop.f32.mrf.mxu0
    %v269 = vadd.f32 0.0, %v268
    %v270 = vpop.f32.mrf.mxu0
    %271 = vmatprep.mubr.bf16.mxu0 0
    %272 = vmatmul.mubr.bf16.gmra.mxu0 %v161
    %v273 = vpop.f32.mrf.mxu0
    %v274 = vadd.f32 0.0, %v273
    %v275 = vpop.f32.mrf.mxu0
    %v276 = vpop.f32.mrf.mxu0
    %v277 = vadd.f32 0.0, %v276
    %v278 = vpop.f32.mrf.mxu0
    %279 = vmatprep.mubr.bf16.mxu0 0
    %280 = vmatmul.mubr.bf16.gmra.mxu0 %v162
    %v281 = vpop.f32.mrf.mxu0
    %v282 = vadd.f32 0.0, %v281
    %v283 = vpop.f32.mrf.mxu0
    %v284 = vpop.f32.mrf.mxu0
    %v285 = vadd.f32 0.0, %v284
    %v286 = vpop.f32.mrf.mxu0
    %287 = vmatprep.mubr.bf16.mxu0 0
    %288 = vmatmul.mubr.bf16.gmra.mxu0 %v163
    %v289 = vpop.f32.mrf.mxu0
    %v290 = vadd.f32 0.0, %v289
    %v291 = vpop.f32.mrf.mxu0
    %v292 = vpop.f32.mrf.mxu0
    %v293 = vadd.f32 0.0, %v292
    %v294 = vpop.f32.mrf.mxu0
    %295 = vmatprep.mubr.bf16.mxu0 0
    %296 = vmatmul.mubr.bf16.gmra.mxu0 %v164
    %v297 = vpop.f32.mrf.mxu0
    %v298 = vadd.f32 0.0, %v297
    %v299 = vpop.f32.mrf.mxu0
    %v300 = vpop.f32.mrf.mxu0
    %v301 = vadd.f32 0.0, %v300
    %v302 = vpop.f32.mrf.mxu0
    %303 = vmatprep.mubr.bf16.mxu0 0
    %304 = vmatmul.mubr.bf16.gmra.mxu0 %v165
    %v305 = vpop.f32.mrf.mxu0
    %v306 = vadd.f32 0.0, %v305
    %v307 = vpop.f32.mrf.mxu0
    %v308 = vpop.f32.mrf.mxu0
    %v309 = vadd.f32 0.0, %v308
    %v310 = vpop.f32.mrf.mxu0
    %311 = vmatprep.mubr.bf16.mxu0 0
    %312 = vmatmul.mubr.bf16.gmra.mxu0 %v166
    %v313 = vpop.f32.mrf.mxu0
    %v314 = vadd.f32 0.0, %v313
    %v315 = vpop.f32.mrf.mxu0
    %v316 = vpop.f32.mrf.mxu0
    %v317 = vadd.f32 0.0, %v316
    %v318 = vpop.f32.mrf.mxu0
    %319 = vdwg.mxu0
    %v336 = vunpack.c.l.b16 %v79
    %v337 = vunpack.c.l.b16 %v80
    %v338 = vunpack.c.l.b16 %v81
    %v339 = vunpack.c.l.b16 %v82
    %v340 = vunpack.c.l.b16 %v83
    %v341 = vunpack.c.l.b16 %v84
    %v342 = vunpack.c.l.b16 %v85
    %v343 = vunpack.c.l.b16 %v86
    %v344 = vunpack.c.l.b16 %v87
    %v345 = vunpack.c.l.b16 %v88
    %v346 = vunpack.c.l.b16 %v89
    %v347 = vunpack.c.l.b16 %v90
    %v348 = vunpack.c.l.b16 %v91
    %v349 = vunpack.c.l.b16 %v92
    %v350 = vunpack.c.l.b16 %v93
    %v351 = vunpack.c.l.b16 %v94
    %v352 = vpack.c.b16 %v337, %v336
    %v353 = vpack.c.b16 %v339, %v338
    %v354 = vpack.c.b16 %v341, %v340
    %v355 = vpack.c.b16 %v343, %v342
    %v356 = vpack.c.b16 %v345, %v344
    %v357 = vpack.c.b16 %v347, %v346
    %v358 = vpack.c.b16 %v349, %v348
    %v359 = vpack.c.b16 %v351, %v350
    %v384 = vunpack.c.l.b16 %v111
    %v385 = vunpack.c.l.b16 %v112
    %v386 = vunpack.c.l.b16 %v113
    %v387 = vunpack.c.l.b16 %v114
    %v388 = vunpack.c.l.b16 %v115
    %v389 = vunpack.c.l.b16 %v116
    %v390 = vunpack.c.l.b16 %v117
    %v391 = vunpack.c.l.b16 %v118
    %v392 = vunpack.c.l.b16 %v119
    %v393 = vunpack.c.l.b16 %v120
    %v394 = vunpack.c.l.b16 %v121
    %v395 = vunpack.c.l.b16 %v122
    %v396 = vunpack.c.l.b16 %v123
    %v397 = vunpack.c.l.b16 %v124
    %v398 = vunpack.c.l.b16 %v125
    %v399 = vunpack.c.l.b16 %v126
    %v400 = vpack.c.b16 %v385, %v384
    %v401 = vpack.c.b16 %v387, %v386
    %v402 = vpack.c.b16 %v389, %v388
    %v403 = vpack.c.b16 %v391, %v390
    %v404 = vpack.c.b16 %v393, %v392
    %v405 = vpack.c.b16 %v395, %v394
    %v406 = vpack.c.b16 %v397, %v396
    %v407 = vpack.c.b16 %v399, %v398
    %416 = vmatprep.subr.bf16.mxu0 0
    %417 = vmatpush1.bf16.xpose.msra.mxu0 %v407
    %418 = vmatprep.subr.bf16.mxu0 0
    %419 = vmatpush1.bf16.xpose.msra.mxu0 %v406
    %420 = vmatprep.subr.bf16.mxu0 0
    %421 = vmatpush1.bf16.xpose.msra.mxu0 %v405
    %422 = vmatprep.subr.bf16.mxu0 0
    %423 = vmatpush1.bf16.xpose.msra.mxu0 %v404
    %424 = vmatprep.subr.bf16.mxu0 0
    %425 = vmatpush1.bf16.xpose.msra.mxu0 %v403
    %426 = vmatprep.subr.bf16.mxu0 0
    %427 = vmatpush1.bf16.xpose.msra.mxu0 %v402
    %428 = vmatprep.subr.bf16.mxu0 0
    %429 = vmatpush1.bf16.xpose.msra.mxu0 %v401
    %430 = vmatprep.subr.bf16.mxu0 0
    %431 = vmatpush1.bf16.xpose.msra.mxu0 %v400
    %432 = vmatprep.subr.bf16.mxu0 0
    %433 = vmatpush2.bf16.xpose.msra.mxu0 0
    %434 = vmatprep.subr.bf16.mxu0 0
    %435 = vmatpush2.bf16.xpose.msra.mxu0 0
    %436 = vmatprep.subr.bf16.mxu0 0
    %437 = vmatpush2.bf16.xpose.msra.mxu0 0
    %438 = vmatprep.subr.bf16.mxu0 0
    %439 = vmatpush2.bf16.xpose.msra.mxu0 0
    %440 = vmatprep.subr.bf16.mxu0 0
    %441 = vmatpush2.bf16.xpose.msra.mxu0 0
    %442 = vmatprep.subr.bf16.mxu0 0
    %443 = vmatpush2.bf16.xpose.msra.mxu0 0
    %444 = vmatprep.subr.bf16.mxu0 0
    %445 = vmatpush2.bf16.xpose.msra.mxu0 0
    %446 = vmatprep.subr.bf16.mxu0 0
    %447 = vmatpush2.bf16.xpose.msra.mxu0 0
    %448 = vmatprep.mubr.bf16.mxu0 0
    %449 = vmatmul.mubr.bf16.gmra.mxu0 %v352
    %v450 = vpop.f32.mrf.mxu0
    %v451 = vadd.f32 0.0, %v450
    %v452 = vpop.f32.mrf.mxu0
    %v453 = vpop.f32.mrf.mxu0
    %v454 = vadd.f32 0.0, %v453
    %v455 = vpop.f32.mrf.mxu0
    %456 = vmatprep.mubr.bf16.mxu0 0
    %457 = vmatmul.mubr.bf16.gmra.mxu0 %v353
    %v458 = vpop.f32.mrf.mxu0
    %v459 = vadd.f32 0.0, %v458
    %v460 = vpop.f32.mrf.mxu0
    %v461 = vpop.f32.mrf.mxu0
    %v462 = vadd.f32 0.0, %v461
    %v463 = vpop.f32.mrf.mxu0
    %464 = vmatprep.mubr.bf16.mxu0 0
    %465 = vmatmul.mubr.bf16.gmra.mxu0 %v354
    %v466 = vpop.f32.mrf.mxu0
    %v467 = vadd.f32 0.0, %v466
    %v468 = vpop.f32.mrf.mxu0
    %v469 = vpop.f32.mrf.mxu0
    %v470 = vadd.f32 0.0, %v469
    %v471 = vpop.f32.mrf.mxu0
    %472 = vmatprep.mubr.bf16.mxu0 0
    %473 = vmatmul.mubr.bf16.gmra.mxu0 %v355
    %v474 = vpop.f32.mrf.mxu0
    %v475 = vadd.f32 0.0, %v474
    %v476 = vpop.f32.mrf.mxu0
    %v477 = vpop.f32.mrf.mxu0
    %v478 = vadd.f32 0.0, %v477
    %v479 = vpop.f32.mrf.mxu0
    %480 = vmatprep.mubr.bf16.mxu0 0
    %481 = vmatmul.mubr.bf16.gmra.mxu0 %v356
    %v482 = vpop.f32.mrf.mxu0
    %v483 = vadd.f32 0.0, %v482
    %v484 = vpop.f32.mrf.mxu0
    %v485 = vpop.f32.mrf.mxu0
    %v486 = vadd.f32 0.0, %v485
    %v487 = vpop.f32.mrf.mxu0
    %488 = vmatprep.mubr.bf16.mxu0 0
    %489 = vmatmul.mubr.bf16.gmra.mxu0 %v357
    %v490 = vpop.f32.mrf.mxu0
    %v491 = vadd.f32 0.0, %v490
    %v492 = vpop.f32.mrf.mxu0
    %v493 = vpop.f32.mrf.mxu0
    %v494 = vadd.f32 0.0, %v493
    %v495 = vpop.f32.mrf.mxu0
    %496 = vmatprep.mubr.bf16.mxu0 0
    %497 = vmatmul.mubr.bf16.gmra.mxu0 %v358
    %v498 = vpop.f32.mrf.mxu0
    %v499 = vadd.f32 0.0, %v498
    %v500 = vpop.f32.mrf.mxu0
    %v501 = vpop.f32.mrf.mxu0
    %v502 = vadd.f32 0.0, %v501
    %v503 = vpop.f32.mrf.mxu0
    %504 = vmatprep.mubr.bf16.mxu0 0
    %505 = vmatmul.mubr.bf16.gmra.mxu0 %v359
    %v506 = vpop.f32.mrf.mxu0
    %v507 = vadd.f32 0.0, %v506
    %v508 = vpop.f32.mrf.mxu0
    %v509 = vpop.f32.mrf.mxu0
    %v510 = vadd.f32 0.0, %v509
    %v511 = vpop.f32.mrf.mxu0
    %512 = vdwg.mxu0
    %v513 = vmul.f32 %v258, 0.088388346
    %v514 = vmul.f32 %v261, 0.088388346
    %v515 = vmul.f32 %v266, 0.088388346
    %v516 = vmul.f32 %v269, 0.088388346
    %v517 = vmul.f32 %v274, 0.088388346
    %v518 = vmul.f32 %v277, 0.088388346
    %v519 = vmul.f32 %v282, 0.088388346
    %v520 = vmul.f32 %v285, 0.088388346
    %v521 = vmul.f32 %v290, 0.088388346
    %v522 = vmul.f32 %v293, 0.088388346
    %v523 = vmul.f32 %v298, 0.088388346
    %v524 = vmul.f32 %v301, 0.088388346
    %v525 = vmul.f32 %v306, 0.088388346
    %v526 = vmul.f32 %v309, 0.088388346
    %v527 = vmul.f32 %v314, 0.088388346
    %v528 = vmul.f32 %v317, 0.088388346
    %v529 = vmul.f32 %v451, 0.088388346
    %v530 = vmul.f32 %v454, 0.088388346
    %v531 = vmul.f32 %v459, 0.088388346
    %v532 = vmul.f32 %v462, 0.088388346
    %v533 = vmul.f32 %v467, 0.088388346
    %v534 = vmul.f32 %v470, 0.088388346
    %v535 = vmul.f32 %v475, 0.088388346
    %v536 = vmul.f32 %v478, 0.088388346
    %v537 = vmul.f32 %v483, 0.088388346
    %v538 = vmul.f32 %v486, 0.088388346
    %v539 = vmul.f32 %v491, 0.088388346
    %v540 = vmul.f32 %v494, 0.088388346
    %v541 = vmul.f32 %v499, 0.088388346
    %v542 = vmul.f32 %v502, 0.088388346
    %v543 = vmul.f32 %v507, 0.088388346
    %v544 = vmul.f32 %v510, 0.088388346
    %545 = vmax.xlane.f32.xlu0 %v513
    %v546 = vpop.xlane.xlu0 %545
    %547 = vmax.xlane.f32.xlu0 %v514
    %v548 = vpop.xlane.xlu0 %547
    %549 = vmax.xlane.f32.xlu0 %v515
    %v550 = vpop.xlane.xlu0 %549
    %551 = vmax.xlane.f32.xlu0 %v516
    %v552 = vpop.xlane.xlu0 %551
    %553 = vmax.xlane.f32.xlu0 %v517
    %v554 = vpop.xlane.xlu0 %553
    %555 = vmax.xlane.f32.xlu0 %v518
    %v556 = vpop.xlane.xlu0 %555
    %557 = vmax.xlane.f32.xlu0 %v519
    %v558 = vpop.xlane.xlu0 %557
    %559 = vmax.xlane.f32.xlu0 %v520
    %v560 = vpop.xlane.xlu0 %559
    %561 = vmax.xlane.f32.xlu0 %v521
    %v562 = vpop.xlane.xlu0 %561
    %563 = vmax.xlane.f32.xlu0 %v522
    %v564 = vpop.xlane.xlu0 %563
    %565 = vmax.xlane.f32.xlu0 %v523
    %v566 = vpop.xlane.xlu0 %565
    %567 = vmax.xlane.f32.xlu0 %v524
    %v568 = vpop.xlane.xlu0 %567
    %569 = vmax.xlane.f32.xlu0 %v525
    %v570 = vpop.xlane.xlu0 %569
    %571 = vmax.xlane.f32.xlu0 %v526
    %v572 = vpop.xlane.xlu0 %571
    %573 = vmax.xlane.f32.xlu0 %v527
    %v574 = vpop.xlane.xlu0 %573
    %575 = vmax.xlane.f32.xlu0 %v528
    %v576 = vpop.xlane.xlu0 %575
    %577 = vmax.xlane.f32.xlu0 %v529
    %v578 = vpop.xlane.xlu0 %577
    %579 = vmax.xlane.f32.xlu0 %v530
    %v580 = vpop.xlane.xlu0 %579
    %581 = vmax.xlane.f32.xlu0 %v531
    %v582 = vpop.xlane.xlu0 %581
    %583 = vmax.xlane.f32.xlu0 %v532
    %v584 = vpop.xlane.xlu0 %583
    %585 = vmax.xlane.f32.xlu0 %v533
    %v586 = vpop.xlane.xlu0 %585
    %587 = vmax.xlane.f32.xlu0 %v534
    %v588 = vpop.xlane.xlu0 %587
    %589 = vmax.xlane.f32.xlu0 %v535
    %v590 = vpop.xlane.xlu0 %589
    %591 = vmax.xlane.f32.xlu0 %v536
    %v592 = vpop.xlane.xlu0 %591
    %593 = vmax.xlane.f32.xlu0 %v537
    %v594 = vpop.xlane.xlu0 %593
    %595 = vmax.xlane.f32.xlu0 %v538
    %v596 = vpop.xlane.xlu0 %595
    %597 = vmax.xlane.f32.xlu0 %v539
    %v598 = vpop.xlane.xlu0 %597
    %599 = vmax.xlane.f32.xlu0 %v540
    %v600 = vpop.xlane.xlu0 %599
    %601 = vmax.xlane.f32.xlu0 %v541
    %v602 = vpop.xlane.xlu0 %601
    %603 = vmax.xlane.f32.xlu0 %v542
    %v604 = vpop.xlane.xlu0 %603
    %605 = vmax.xlane.f32.xlu0 %v543
    %v606 = vpop.xlane.xlu0 %605
    %607 = vmax.xlane.f32.xlu0 %v544
    %v608 = vpop.xlane.xlu0 %607
    %v609 = vsub.f32 %v513, %v546
    %v610 = vsub.f32 %v514, %v548
    %v611 = vsub.f32 %v515, %v550
    %v612 = vsub.f32 %v516, %v552
    %v613 = vsub.f32 %v517, %v554
    %v614 = vsub.f32 %v518, %v556
    %v615 = vsub.f32 %v519, %v558
    %v616 = vsub.f32 %v520, %v560
    %v617 = vsub.f32 %v521, %v562
    %v618 = vsub.f32 %v522, %v564
    %v619 = vsub.f32 %v523, %v566
    %v620 = vsub.f32 %v524, %v568
    %v621 = vsub.f32 %v525, %v570
    %v622 = vsub.f32 %v526, %v572
    %v623 = vsub.f32 %v527, %v574
    %v624 = vsub.f32 %v528, %v576
    %v625 = vsub.f32 %v529, %v578
    %v626 = vsub.f32 %v530, %v580
    %v627 = vsub.f32 %v531, %v582
    %v628 = vsub.f32 %v532, %v584
    %v629 = vsub.f32 %v533, %v586
    %v630 = vsub.f32 %v534, %v588
    %v631 = vsub.f32 %v535, %v590
    %v632 = vsub.f32 %v536, %v592
    %v633 = vsub.f32 %v537, %v594
    %v634 = vsub.f32 %v538, %v596
    %v635 = vsub.f32 %v539, %v598
    %v636 = vsub.f32 %v540, %v600
    %v637 = vsub.f32 %v541, %v602
    %v638 = vsub.f32 %v542, %v604
    %v639 = vsub.f32 %v543, %v606
    %v640 = vsub.f32 %v544, %v608
    %v641 = vmul.f32 %v609, 1.442695
    %v642 = vpow.pop %v641
    %v643 = vmul.f32 %v610, 1.442695
    %v644 = vpow.pop %v643
    %v645 = vmul.f32 %v611, 1.442695
    %v646 = vpow.pop %v645
    %v647 = vmul.f32 %v612, 1.442695
    %v648 = vpow.pop %v647
    %v649 = vmul.f32 %v613, 1.442695
    %v650 = vpow.pop %v649
    %v651 = vmul.f32 %v614, 1.442695
    %v652 = vpow.pop %v651
    %v653 = vmul.f32 %v615, 1.442695
    %v654 = vpow.pop %v653
    %v655 = vmul.f32 %v616, 1.442695
    %v656 = vpow.pop %v655
    %v657 = vmul.f32 %v617, 1.442695
    %v658 = vpow.pop %v657
    %v659 = vmul.f32 %v618, 1.442695
    %v660 = vpow.pop %v659
    %v661 = vmul.f32 %v619, 1.442695
    %v662 = vpow.pop %v661
    %v663 = vmul.f32 %v620, 1.442695
    %v664 = vpow.pop %v663
    %v665 = vmul.f32 %v621, 1.442695
    %v666 = vpow.pop %v665
    %v667 = vmul.f32 %v622, 1.442695
    %v668 = vpow.pop %v667
    %v669 = vmul.f32 %v623, 1.442695
    %v670 = vpow.pop %v669
    %v671 = vmul.f32 %v624, 1.442695
    %v672 = vpow.pop %v671
    %v673 = vmul.f32 %v625, 1.442695
    %v674 = vpow.pop %v673
    %v675 = vmul.f32 %v626, 1.442695
    %v676 = vpow.pop %v675
    %v677 = vmul.f32 %v627, 1.442695
    %v678 = vpow.pop %v677
    %v679 = vmul.f32 %v628, 1.442695
    %v680 = vpow.pop %v679
    %v681 = vmul.f32 %v629, 1.442695
    %v682 = vpow.pop %v681
    %v683 = vmul.f32 %v630, 1.442695
    %v684 = vpow.pop %v683
    %v685 = vmul.f32 %v631, 1.442695
    %v686 = vpow.pop %v685
    %v687 = vmul.f32 %v632, 1.442695
    %v688 = vpow.pop %v687
    %v689 = vmul.f32 %v633, 1.442695
    %v690 = vpow.pop %v689
    %v691 = vmul.f32 %v634, 1.442695
    %v692 = vpow.pop %v691
    %v693 = vmul.f32 %v635, 1.442695
    %v694 = vpow.pop %v693
    %v695 = vmul.f32 %v636, 1.442695
    %v696 = vpow.pop %v695
    %v697 = vmul.f32 %v637, 1.442695
    %v698 = vpow.pop %v697
    %v699 = vmul.f32 %v638, 1.442695
    %v700 = vpow.pop %v699
    %v701 = vmul.f32 %v639, 1.442695
    %v702 = vpow.pop %v701
    %v703 = vmul.f32 %v640, 1.442695
    %v704 = vpow.pop %v703
    %705 = vadd.xlane.f32.xlu0 %v642
    %v706 = vpop.xlane.xlu0 %705
    %707 = vadd.xlane.f32.xlu0 %v644
    %v708 = vpop.xlane.xlu0 %707
    %709 = vadd.xlane.f32.xlu0 %v646
    %v710 = vpop.xlane.xlu0 %709
    %711 = vadd.xlane.f32.xlu0 %v648
    %v712 = vpop.xlane.xlu0 %711
    %713 = vadd.xlane.f32.xlu0 %v650
    %v714 = vpop.xlane.xlu0 %713
    %715 = vadd.xlane.f32.xlu0 %v652
    %v716 = vpop.xlane.xlu0 %715
    %717 = vadd.xlane.f32.xlu0 %v654
    %v718 = vpop.xlane.xlu0 %717
    %719 = vadd.xlane.f32.xlu0 %v656
    %v720 = vpop.xlane.xlu0 %719
    %721 = vadd.xlane.f32.xlu0 %v658
    %v722 = vpop.xlane.xlu0 %721
    %723 = vadd.xlane.f32.xlu0 %v660
    %v724 = vpop.xlane.xlu0 %723
    %725 = vadd.xlane.f32.xlu0 %v662
    %v726 = vpop.xlane.xlu0 %725
    %727 = vadd.xlane.f32.xlu0 %v664
    %v728 = vpop.xlane.xlu0 %727
    %729 = vadd.xlane.f32.xlu0 %v666
    %v730 = vpop.xlane.xlu0 %729
    %731 = vadd.xlane.f32.xlu0 %v668
    %v732 = vpop.xlane.xlu0 %731
    %733 = vadd.xlane.f32.xlu0 %v670
    %v734 = vpop.xlane.xlu0 %733
    %735 = vadd.xlane.f32.xlu0 %v672
    %v736 = vpop.xlane.xlu0 %735
    %737 = vadd.xlane.f32.xlu0 %v674
    %v738 = vpop.xlane.xlu0 %737
    %739 = vadd.xlane.f32.xlu0 %v676
    %v740 = vpop.xlane.xlu0 %739
    %741 = vadd.xlane.f32.xlu0 %v678
    %v742 = vpop.xlane.xlu0 %741
    %743 = vadd.xlane.f32.xlu0 %v680
    %v744 = vpop.xlane.xlu0 %743
    %745 = vadd.xlane.f32.xlu0 %v682
    %v746 = vpop.xlane.xlu0 %745
    %747 = vadd.xlane.f32.xlu0 %v684
    %v748 = vpop.xlane.xlu0 %747
    %749 = vadd.xlane.f32.xlu0 %v686
    %v750 = vpop.xlane.xlu0 %749
    %751 = vadd.xlane.f32.xlu0 %v688
    %v752 = vpop.xlane.xlu0 %751
    %753 = vadd.xlane.f32.xlu0 %v690
    %v754 = vpop.xlane.xlu0 %753
    %755 = vadd.xlane.f32.xlu0 %v692
    %v756 = vpop.xlane.xlu0 %755
    %757 = vadd.xlane.f32.xlu0 %v694
    %v758 = vpop.xlane.xlu0 %757
    %759 = vadd.xlane.f32.xlu0 %v696
    %v760 = vpop.xlane.xlu0 %759
    %761 = vadd.xlane.f32.xlu0 %v698
    %v762 = vpop.xlane.xlu0 %761
    %763 = vadd.xlane.f32.xlu0 %v700
    %v764 = vpop.xlane.xlu0 %763
    %765 = vadd.xlane.f32.xlu0 %v702
    %v766 = vpop.xlane.xlu0 %765
    %767 = vadd.xlane.f32.xlu0 %v704
    %v768 = vpop.xlane.xlu0 %767
    %v769 = vrcp.pop %v706
    %v770 = vrcp.pop %v708
    %v771 = vrcp.pop %v710
    %v772 = vrcp.pop %v712
    %v773 = vrcp.pop %v714
    %v774 = vrcp.pop %v716
    %v775 = vrcp.pop %v718
    %v776 = vrcp.pop %v720
    %v777 = vrcp.pop %v722
    %v778 = vrcp.pop %v724
    %v779 = vrcp.pop %v726
    %v780 = vrcp.pop %v728
    %v781 = vrcp.pop %v730
    %v782 = vrcp.pop %v732
    %v783 = vrcp.pop %v734
    %v784 = vrcp.pop %v736
    %v785 = vrcp.pop %v738
    %v786 = vrcp.pop %v740
    %v787 = vrcp.pop %v742
    %v788 = vrcp.pop %v744
    %v789 = vrcp.pop %v746
    %v790 = vrcp.pop %v748
    %v791 = vrcp.pop %v750
    %v792 = vrcp.pop %v752
    %v793 = vrcp.pop %v754
    %v794 = vrcp.pop %v756
    %v795 = vrcp.pop %v758
    %v796 = vrcp.pop %v760
    %v797 = vrcp.pop %v762
    %v798 = vrcp.pop %v764
    %v799 = vrcp.pop %v766
    %v800 = vrcp.pop %v768
    %v801 = vmul.f32 %v642, %v769
    %v802 = vmul.f32 %v644, %v770
    %v803 = vmul.f32 %v646, %v771
    %v804 = vmul.f32 %v648, %v772
    %v805 = vmul.f32 %v650, %v773
    %v806 = vmul.f32 %v652, %v774
    %v807 = vmul.f32 %v654, %v775
    %v808 = vmul.f32 %v656, %v776
    %v809 = vmul.f32 %v658, %v777
    %v810 = vmul.f32 %v660, %v778
    %v811 = vmul.f32 %v662, %v779
    %v812 = vmul.f32 %v664, %v780
    %v813 = vmul.f32 %v666, %v781
    %v814 = vmul.f32 %v668, %v782
    %v815 = vmul.f32 %v670, %v783
    %v816 = vmul.f32 %v672, %v784
    %v817 = vmul.f32 %v674, %v785
    %v818 = vmul.f32 %v676, %v786
    %v819 = vmul.f32 %v678, %v787
    %v820 = vmul.f32 %v680, %v788
    %v821 = vmul.f32 %v682, %v789
    %v822 = vmul.f32 %v684, %v790
    %v823 = vmul.f32 %v686, %v791
    %v824 = vmul.f32 %v688, %v792
    %v825 = vmul.f32 %v690, %v793
    %v826 = vmul.f32 %v692, %v794
    %v827 = vmul.f32 %v694, %v795
    %v828 = vmul.f32 %v696, %v796
    %v829 = vmul.f32 %v698, %v797
    %v830 = vmul.f32 %v700, %v798
    %v831 = vmul.f32 %v702, %v799
    %v832 = vmul.f32 %v704, %v800
    %v833 = vpack.c.bf16 %v802, %v801
    %v834 = vpack.c.bf16 %v804, %v803
    %v835 = vpack.c.bf16 %v806, %v805
    %v836 = vpack.c.bf16 %v808, %v807
    %v837 = vpack.c.bf16 %v810, %v809
    %v838 = vpack.c.bf16 %v812, %v811
    %v839 = vpack.c.bf16 %v814, %v813
    %v840 = vpack.c.bf16 %v816, %v815
    %v841 = vpack.c.bf16 %v818, %v817
    %v842 = vpack.c.bf16 %v820, %v819
    %v843 = vpack.c.bf16 %v822, %v821
    %v844 = vpack.c.bf16 %v824, %v823
    %v845 = vpack.c.bf16 %v826, %v825
    %v846 = vpack.c.bf16 %v828, %v827
    %v847 = vpack.c.bf16 %v830, %v829
    %v848 = vpack.c.bf16 %v832, %v831
    %849 = vmatprep.subr.bf16.mxu0 0
    %850 = vmatpush1.bf16.msra.mxu0 %v214
    %851 = vmatprep.subr.bf16.mxu0 0
    %852 = vmatpush1.bf16.msra.mxu0 %v213
    %853 = vmatprep.subr.bf16.mxu0 0
    %854 = vmatpush1.bf16.msra.mxu0 %v212
    %855 = vmatprep.subr.bf16.mxu0 0
    %856 = vmatpush1.bf16.msra.mxu0 %v211
    %857 = vmatprep.subr.bf16.mxu0 0
    %858 = vmatpush1.bf16.msra.mxu0 %v210
    %859 = vmatprep.subr.bf16.mxu0 0
    %860 = vmatpush1.bf16.msra.mxu0 %v209
    %861 = vmatprep.subr.bf16.mxu0 0
    %862 = vmatpush1.bf16.msra.mxu0 %v208
    %863 = vmatprep.subr.bf16.mxu0 0
    %864 = vmatpush1.bf16.msra.mxu0 %v207
    %865 = vmatprep.subr.bf16.mxu0 0
    %866 = vmatpush2.bf16.msra.mxu0 0
    %867 = vmatprep.subr.bf16.mxu0 0
    %868 = vmatpush2.bf16.msra.mxu0 0
    %869 = vmatprep.subr.bf16.mxu0 0
    %870 = vmatpush2.bf16.msra.mxu0 0
    %871 = vmatprep.subr.bf16.mxu0 0
    %872 = vmatpush2.bf16.msra.mxu0 0
    %873 = vmatprep.subr.bf16.mxu0 0
    %874 = vmatpush2.bf16.msra.mxu0 0
    %875 = vmatprep.subr.bf16.mxu0 0
    %876 = vmatpush2.bf16.msra.mxu0 0
    %877 = vmatprep.subr.bf16.mxu0 0
    %878 = vmatpush2.bf16.msra.mxu0 0
    %879 = vmatprep.subr.bf16.mxu0 0
    %880 = vmatpush2.bf16.msra.mxu0 0
    %881 = vmatprep.mubr.bf16.mxu0 0
    %882 = vmatmul.mubr.bf16.gmra.mxu0 %v833
    %v883 = vpop.f32.mrf.mxu0
    %v884 = vadd.f32 0.0, %v883
    %v885 = vpop.f32.mrf.mxu0
    %v886 = vpop.f32.mrf.mxu0
    %v887 = vadd.f32 0.0, %v886
    %v888 = vpop.f32.mrf.mxu0
    %889 = vmatprep.mubr.bf16.mxu0 0
    %890 = vmatmul.mubr.bf16.gmra.mxu0 %v834
    %v891 = vpop.f32.mrf.mxu0
    %v892 = vadd.f32 0.0, %v891
    %v893 = vpop.f32.mrf.mxu0
    %v894 = vpop.f32.mrf.mxu0
    %v895 = vadd.f32 0.0, %v894
    %v896 = vpop.f32.mrf.mxu0
    %897 = vmatprep.mubr.bf16.mxu0 0
    %898 = vmatmul.mubr.bf16.gmra.mxu0 %v835
    %v899 = vpop.f32.mrf.mxu0
    %v900 = vadd.f32 0.0, %v899
    %v901 = vpop.f32.mrf.mxu0
    %v902 = vpop.f32.mrf.mxu0
    %v903 = vadd.f32 0.0, %v902
    %v904 = vpop.f32.mrf.mxu0
    %905 = vmatprep.mubr.bf16.mxu0 0
    %906 = vmatmul.mubr.bf16.gmra.mxu0 %v836
    %v907 = vpop.f32.mrf.mxu0
    %v908 = vadd.f32 0.0, %v907
    %v909 = vpop.f32.mrf.mxu0
    %v910 = vpop.f32.mrf.mxu0
    %v911 = vadd.f32 0.0, %v910
    %v912 = vpop.f32.mrf.mxu0
    %913 = vmatprep.mubr.bf16.mxu0 0
    %914 = vmatmul.mubr.bf16.gmra.mxu0 %v837
    %v915 = vpop.f32.mrf.mxu0
    %v916 = vadd.f32 0.0, %v915
    %v917 = vpop.f32.mrf.mxu0
    %v918 = vpop.f32.mrf.mxu0
    %v919 = vadd.f32 0.0, %v918
    %v920 = vpop.f32.mrf.mxu0
    %921 = vmatprep.mubr.bf16.mxu0 0
    %922 = vmatmul.mubr.bf16.gmra.mxu0 %v838
    %v923 = vpop.f32.mrf.mxu0
    %v924 = vadd.f32 0.0, %v923
    %v925 = vpop.f32.mrf.mxu0
    %v926 = vpop.f32.mrf.mxu0
    %v927 = vadd.f32 0.0, %v926
    %v928 = vpop.f32.mrf.mxu0
    %929 = vmatprep.mubr.bf16.mxu0 0
    %930 = vmatmul.mubr.bf16.gmra.mxu0 %v839
    %v931 = vpop.f32.mrf.mxu0
    %v932 = vadd.f32 0.0, %v931
    %v933 = vpop.f32.mrf.mxu0
    %v934 = vpop.f32.mrf.mxu0
    %v935 = vadd.f32 0.0, %v934
    %v936 = vpop.f32.mrf.mxu0
    %937 = vmatprep.mubr.bf16.mxu0 0
    %938 = vmatmul.mubr.bf16.gmra.mxu0 %v840
    %v939 = vpop.f32.mrf.mxu0
    %v940 = vadd.f32 0.0, %v939
    %v941 = vpop.f32.mrf.mxu0
    %v942 = vpop.f32.mrf.mxu0
    %v943 = vadd.f32 0.0, %v942
    %v944 = vpop.f32.mrf.mxu0
    %945 = vdwg.mxu0
    %946 = vmatprep.subr.bf16.mxu0 0
    %947 = vmatpush1.bf16.msra.mxu0 %v407
    %948 = vmatprep.subr.bf16.mxu0 0
    %949 = vmatpush1.bf16.msra.mxu0 %v406
    %950 = vmatprep.subr.bf16.mxu0 0
    %951 = vmatpush1.bf16.msra.mxu0 %v405
    %952 = vmatprep.subr.bf16.mxu0 0
    %953 = vmatpush1.bf16.msra.mxu0 %v404
    %954 = vmatprep.subr.bf16.mxu0 0
    %955 = vmatpush1.bf16.msra.mxu0 %v403
    %956 = vmatprep.subr.bf16.mxu0 0
    %957 = vmatpush1.bf16.msra.mxu0 %v402
    %958 = vmatprep.subr.bf16.mxu0 0
    %959 = vmatpush1.bf16.msra.mxu0 %v401
    %960 = vmatprep.subr.bf16.mxu0 0
    %961 = vmatpush1.bf16.msra.mxu0 %v400
    %962 = vmatprep.subr.bf16.mxu0 0
    %963 = vmatpush2.bf16.msra.mxu0 0
    %964 = vmatprep.subr.bf16.mxu0 0
    %965 = vmatpush2.bf16.msra.mxu0 0
    %966 = vmatprep.subr.bf16.mxu0 0
    %967 = vmatpush2.bf16.msra.mxu0 0
    %968 = vmatprep.subr.bf16.mxu0 0
    %969 = vmatpush2.bf16.msra.mxu0 0
    %970 = vmatprep.subr.bf16.mxu0 0
    %971 = vmatpush2.bf16.msra.mxu0 0
    %972 = vmatprep.subr.bf16.mxu0 0
    %973 = vmatpush2.bf16.msra.mxu0 0
    %974 = vmatprep.subr.bf16.mxu0 0
    %975 = vmatpush2.bf16.msra.mxu0 0
    %976 = vmatprep.subr.bf16.mxu0 0
    %977 = vmatpush2.bf16.msra.mxu0 0
    %978 = vmatprep.mubr.bf16.mxu0 0
    %979 = vmatmul.mubr.bf16.gmra.mxu0 %v841
    %v980 = vpop.f32.mrf.mxu0
    %v981 = vadd.f32 0.0, %v980
    %v982 = vpop.f32.mrf.mxu0
    %v983 = vpop.f32.mrf.mxu0
    %v984 = vadd.f32 0.0, %v983
    %v985 = vpop.f32.mrf.mxu0
    %986 = vmatprep.mubr.bf16.mxu0 0
    %987 = vmatmul.mubr.bf16.gmra.mxu0 %v842
    %v988 = vpop.f32.mrf.mxu0
    %v989 = vadd.f32 0.0, %v988
    %v990 = vpop.f32.mrf.mxu0
    %v991 = vpop.f32.mrf.mxu0
    %v992 = vadd.f32 0.0, %v991
    %v993 = vpop.f32.mrf.mxu0
    %994 = vmatprep.mubr.bf16.mxu0 0
    %995 = vmatmul.mubr.bf16.gmra.mxu0 %v843
    %v996 = vpop.f32.mrf.mxu0
    %v997 = vadd.f32 0.0, %v996
    %v998 = vpop.f32.mrf.mxu0
    %v999 = vpop.f32.mrf.mxu0
    %v1000 = vadd.f32 0.0, %v999
    %v1001 = vpop.f32.mrf.mxu0
    %1002 = vmatprep.mubr.bf16.mxu0 0
    %1003 = vmatmul.mubr.bf16.gmra.mxu0 %v844
    %v1004 = vpop.f32.mrf.mxu0
    %v1005 = vadd.f32 0.0, %v1004
    %v1006 = vpop.f32.mrf.mxu0
    %v1007 = vpop.f32.mrf.mxu0
    %v1008 = vadd.f32 0.0, %v1007
    %v1009 = vpop.f32.mrf.mxu0
    %1010 = vmatprep.mubr.bf16.mxu0 0
    %1011 = vmatmul.mubr.bf16.gmra.mxu0 %v845
    %v1012 = vpop.f32.mrf.mxu0
    %v1013 = vadd.f32 0.0, %v1012
    %v1014 = vpop.f32.mrf.mxu0
    %v1015 = vpop.f32.mrf.mxu0
    %v1016 = vadd.f32 0.0, %v1015
    %v1017 = vpop.f32.mrf.mxu0
    %1018 = vmatprep.mubr.bf16.mxu0 0
    %1019 = vmatmul.mubr.bf16.gmra.mxu0 %v846
    %v1020 = vpop.f32.mrf.mxu0
    %v1021 = vadd.f32 0.0, %v1020
    %v1022 = vpop.f32.mrf.mxu0
    %v1023 = vpop.f32.mrf.mxu0
    %v1024 = vadd.f32 0.0, %v1023
    %v1025 = vpop.f32.mrf.mxu0
    %1026 = vmatprep.mubr.bf16.mxu0 0
    %1027 = vmatmul.mubr.bf16.gmra.mxu0 %v847
    %v1028 = vpop.f32.mrf.mxu0
    %v1029 = vadd.f32 0.0, %v1028
    %v1030 = vpop.f32.mrf.mxu0
    %v1031 = vpop.f32.mrf.mxu0
    %v1032 = vadd.f32 0.0, %v1031
    %v1033 = vpop.f32.mrf.mxu0
    %1034 = vmatprep.mubr.bf16.mxu0 0
    %1035 = vmatmul.mubr.bf16.gmra.mxu0 %v848
    %v1036 = vpop.f32.mrf.mxu0
    %v1037 = vadd.f32 0.0, %v1036
    %v1038 = vpop.f32.mrf.mxu0
    %v1039 = vpop.f32.mrf.mxu0
    %v1040 = vadd.f32 0.0, %v1039
    %v1041 = vpop.f32.mrf.mxu0
    %1042 = vdwg.mxu0
    %v1043 = vpack.c.bf16 %v887, %v884
    %v1044 = vpack.c.bf16 %v895, %v892
    %v1045 = vpack.c.bf16 %v903, %v900
    %v1046 = vpack.c.bf16 %v911, %v908
    %v1047 = vpack.c.bf16 %v919, %v916
    %v1048 = vpack.c.bf16 %v927, %v924
    %v1049 = vpack.c.bf16 %v935, %v932
    %v1050 = vpack.c.bf16 %v943, %v940
    %v1051 = vpack.c.bf16 %v984, %v981
    %v1052 = vpack.c.bf16 %v992, %v989
    %v1053 = vpack.c.bf16 %v1000, %v997
    %v1054 = vpack.c.bf16 %v1008, %v1005
    %v1055 = vpack.c.bf16 %v1016, %v1013
    %v1056 = vpack.c.bf16 %v1024, %v1021
    %v1057 = vpack.c.bf16 %v1032, %v1029
    %v1058 = vpack.c.bf16 %v1040, %v1037
    %v1059 = vld [vmem:[#allocation7] sm:$0xf]
    %v1060 = vld [vmem:[#allocation7 + $0x4] sm:$0xf]
    %v1061 = vld [vmem:[#allocation7 + $0x8] sm:$0xf]
    %v1062 = vld [vmem:[#allocation7 + $0xc] sm:$0xf]
    %v1063 = vld [vmem:[#allocation7 + $0x10] sm:$0xf]
    %v1064 = vld [vmem:[#allocation7 + $0x14] sm:$0xf]
    %v1065 = vld [vmem:[#allocation7 + $0x18] sm:$0xf]
    %v1066 = vld [vmem:[#allocation7 + $0x1c] sm:$0xf]
    %v1067 = vld [vmem:[#allocation7 + $0x20] sm:$0xf]
    %v1068 = vld [vmem:[#allocation7 + $0x24] sm:$0xf]
    %v1069 = vld [vmem:[#allocation7 + $0x28] sm:$0xf]
    %v1070 = vld [vmem:[#allocation7 + $0x2c] sm:$0xf]
    %v1071 = vld [vmem:[#allocation7 + $0x30] sm:$0xf]
    %v1072 = vld [vmem:[#allocation7 + $0x34] sm:$0xf]
    %v1073 = vld [vmem:[#allocation7 + $0x38] sm:$0xf]
    %v1074 = vld [vmem:[#allocation7 + $0x3c] sm:$0xf]
    %v1075 = vld [vmem:[%s3] sm:$0x1]
    %v1077 = vlaneseq
    %v1078 = vshrl.u32 %v1077, 7
    %v1079 = vsub.s32 0, %v1078
    %v1080 = vrot.slane %v1075, %v1079
    %v1098 = vunpack.c.l.b16 %v1059
    %v1099 = vunpack.c.l.b16 %v1060
    %v1100 = vunpack.c.l.b16 %v1061
    %v1101 = vunpack.c.l.b16 %v1062
    %v1102 = vunpack.c.l.b16 %v1063
    %v1103 = vunpack.c.l.b16 %v1064
    %v1104 = vunpack.c.l.b16 %v1065
    %v1105 = vunpack.c.l.b16 %v1066
    %v1106 = vunpack.c.l.b16 %v1067
    %v1107 = vunpack.c.l.b16 %v1068
    %v1108 = vunpack.c.l.b16 %v1069
    %v1109 = vunpack.c.l.b16 %v1070
    %v1110 = vunpack.c.l.b16 %v1071
    %v1111 = vunpack.c.l.b16 %v1072
    %v1112 = vunpack.c.l.b16 %v1073
    %v1113 = vunpack.c.l.b16 %v1074
    %v1114 = vpack.c.b16 %v1099, %v1098
    %v1115 = vpack.c.b16 %v1101, %v1100
    %v1116 = vpack.c.b16 %v1103, %v1102
    %v1117 = vpack.c.b16 %v1105, %v1104
    %v1118 = vpack.c.b16 %v1107, %v1106
    %v1119 = vpack.c.b16 %v1109, %v1108
    %v1120 = vpack.c.b16 %v1111, %v1110
    %v1121 = vpack.c.b16 %v1113, %v1112
    %1130 = vmatprep.subr.bf16.mxu0 0
    %1131 = vmatpush1.bf16.msra.mxu0 %v1121
    %1132 = vmatprep.subr.bf16.mxu0 0
    %1133 = vmatpush1.bf16.msra.mxu0 %v1120
    %1134 = vmatprep.subr.bf16.mxu0 0
    %1135 = vmatpush1.bf16.msra.mxu0 %v1119
    %1136 = vmatprep.subr.bf16.mxu0 0
    %1137 = vmatpush1.bf16.msra.mxu0 %v1118
    %1138 = vmatprep.subr.bf16.mxu0 0
    %1139 = vmatpush1.bf16.msra.mxu0 %v1117
    %1140 = vmatprep.subr.bf16.mxu0 0
    %1141 = vmatpush1.bf16.msra.mxu0 %v1116
    %1142 = vmatprep.subr.bf16.mxu0 0
    %1143 = vmatpush1.bf16.msra.mxu0 %v1115
    %1144 = vmatprep.subr.bf16.mxu0 0
    %1145 = vmatpush1.bf16.msra.mxu0 %v1114
    %1146 = vmatprep.subr.bf16.mxu0 0
    %1147 = vmatpush2.bf16.msra.mxu0 0
    %1148 = vmatprep.subr.bf16.mxu0 0
    %1149 = vmatpush2.bf16.msra.mxu0 0
    %1150 = vmatprep.subr.bf16.mxu0 0
    %1151 = vmatpush2.bf16.msra.mxu0 0
    %1152 = vmatprep.subr.bf16.mxu0 0
    %1153 = vmatpush2.bf16.msra.mxu0 0
    %1154 = vmatprep.subr.bf16.mxu0 0
    %1155 = vmatpush2.bf16.msra.mxu0 0
    %1156 = vmatprep.subr.bf16.mxu0 0
    %1157 = vmatpush2.bf16.msra.mxu0 0
    %1158 = vmatprep.subr.bf16.mxu0 0
    %1159 = vmatpush2.bf16.msra.mxu0 0
    %1160 = vmatprep.subr.bf16.mxu0 0
    %1161 = vmatpush2.bf16.msra.mxu0 0
    %1162 = vmatprep.mubr.bf16.mxu0 0
    %1163 = vmatmul.mubr.bf16.gmra.mxu0 %v1043
    %v1164 = vpop.f32.mrf.mxu0
    %v1165 = vadd.f32 %v1080, %v1164
    %v1166 = vpop.f32.mrf.mxu0
    %v1167 = vpop.f32.mrf.mxu0
    %v1168 = vadd.f32 %v1080, %v1167
    %v1169 = vpop.f32.mrf.mxu0
    %1170 = vmatprep.mubr.bf16.mxu0 0
    %1171 = vmatmul.mubr.bf16.gmra.mxu0 %v1044
    %v1172 = vpop.f32.mrf.mxu0
    %v1173 = vadd.f32 %v1080, %v1172
    %v1174 = vpop.f32.mrf.mxu0
    %v1175 = vpop.f32.mrf.mxu0
    %v1176 = vadd.f32 %v1080, %v1175
    %v1177 = vpop.f32.mrf.mxu0
    %1178 = vmatprep.mubr.bf16.mxu0 0
    %1179 = vmatmul.mubr.bf16.gmra.mxu0 %v1045
    %v1180 = vpop.f32.mrf.mxu0
    %v1181 = vadd.f32 %v1080, %v1180
    %v1182 = vpop.f32.mrf.mxu0
    %v1183 = vpop.f32.mrf.mxu0
    %v1184 = vadd.f32 %v1080, %v1183
    %v1185 = vpop.f32.mrf.mxu0
    %1186 = vmatprep.mubr.bf16.mxu0 0
    %1187 = vmatmul.mubr.bf16.gmra.mxu0 %v1046
    %v1188 = vpop.f32.mrf.mxu0
    %v1189 = vadd.f32 %v1080, %v1188
    %v1190 = vpop.f32.mrf.mxu0
    %v1191 = vpop.f32.mrf.mxu0
    %v1192 = vadd.f32 %v1080, %v1191
    %v1193 = vpop.f32.mrf.mxu0
    %1194 = vmatprep.mubr.bf16.mxu0 0
    %1195 = vmatmul.mubr.bf16.gmra.mxu0 %v1047
    %v1196 = vpop.f32.mrf.mxu0
    %v1197 = vadd.f32 %v1080, %v1196
    %v1198 = vpop.f32.mrf.mxu0
    %v1199 = vpop.f32.mrf.mxu0
    %v1200 = vadd.f32 %v1080, %v1199
    %v1201 = vpop.f32.mrf.mxu0
    %1202 = vmatprep.mubr.bf16.mxu0 0
    %1203 = vmatmul.mubr.bf16.gmra.mxu0 %v1048
    %v1204 = vpop.f32.mrf.mxu0
    %v1205 = vadd.f32 %v1080, %v1204
    %v1206 = vpop.f32.mrf.mxu0
    %v1207 = vpop.f32.mrf.mxu0
    %v1208 = vadd.f32 %v1080, %v1207
    %v1209 = vpop.f32.mrf.mxu0
    %1210 = vmatprep.mubr.bf16.mxu0 0
    %1211 = vmatmul.mubr.bf16.gmra.mxu0 %v1049
    %v1212 = vpop.f32.mrf.mxu0
    %v1213 = vadd.f32 %v1080, %v1212
    %v1214 = vpop.f32.mrf.mxu0
    %v1215 = vpop.f32.mrf.mxu0
    %v1216 = vadd.f32 %v1080, %v1215
    %v1217 = vpop.f32.mrf.mxu0
    %1218 = vmatprep.mubr.bf16.mxu0 0
    %1219 = vmatmul.mubr.bf16.gmra.mxu0 %v1050
    %v1220 = vpop.f32.mrf.mxu0
    %v1221 = vadd.f32 %v1080, %v1220
    %v1222 = vpop.f32.mrf.mxu0
    %v1223 = vpop.f32.mrf.mxu0
    %v1224 = vadd.f32 %v1080, %v1223
    %v1225 = vpop.f32.mrf.mxu0
    %1226 = vmatprep.mubr.bf16.mxu0 0
    %1227 = vmatmul.mubr.bf16.gmra.mxu0 %v1051
    %v1228 = vpop.f32.mrf.mxu0
    %v1229 = vadd.f32 %v1080, %v1228
    %v1230 = vpop.f32.mrf.mxu0
    %v1231 = vpop.f32.mrf.mxu0
    %v1232 = vadd.f32 %v1080, %v1231
    %v1233 = vpop.f32.mrf.mxu0
    %1234 = vmatprep.mubr.bf16.mxu0 0
    %1235 = vmatmul.mubr.bf16.gmra.mxu0 %v1052
    %v1236 = vpop.f32.mrf.mxu0
    %v1237 = vadd.f32 %v1080, %v1236
    %v1238 = vpop.f32.mrf.mxu0
    %v1239 = vpop.f32.mrf.mxu0
    %v1240 = vadd.f32 %v1080, %v1239
    %v1241 = vpop.f32.mrf.mxu0
    %1242 = vmatprep.mubr.bf16.mxu0 0
    %1243 = vmatmul.mubr.bf16.gmra.mxu0 %v1053
    %v1244 = vpop.f32.mrf.mxu0
    %v1245 = vadd.f32 %v1080, %v1244
    %v1246 = vpop.f32.mrf.mxu0
    %v1247 = vpop.f32.mrf.mxu0
    %v1248 = vadd.f32 %v1080, %v1247
    %v1249 = vpop.f32.mrf.mxu0
    %1250 = vmatprep.mubr.bf16.mxu0 0
    %1251 = vmatmul.mubr.bf16.gmra.mxu0 %v1054
    %v1252 = vpop.f32.mrf.mxu0
    %v1253 = vadd.f32 %v1080, %v1252
    %v1254 = vpop.f32.mrf.mxu0
    %v1255 = vpop.f32.mrf.mxu0
    %v1256 = vadd.f32 %v1080, %v1255
    %v1257 = vpop.f32.mrf.mxu0
    %1258 = vmatprep.mubr.bf16.mxu0 0
    %1259 = vmatmul.mubr.bf16.gmra.mxu0 %v1055
    %v1260 = vpop.f32.mrf.mxu0
    %v1261 = vadd.f32 %v1080, %v1260
    %v1262 = vpop.f32.mrf.mxu0
    %v1263 = vpop.f32.mrf.mxu0
    %v1264 = vadd.f32 %v1080, %v1263
    %v1265 = vpop.f32.mrf.mxu0
    %1266 = vmatprep.mubr.bf16.mxu0 0
    %1267 = vmatmul.mubr.bf16.gmra.mxu0 %v1056
    %v1268 = vpop.f32.mrf.mxu0
    %v1269 = vadd.f32 %v1080, %v1268
    %v1270 = vpop.f32.mrf.mxu0
    %v1271 = vpop.f32.mrf.mxu0
    %v1272 = vadd.f32 %v1080, %v1271
    %v1273 = vpop.f32.mrf.mxu0
    %1274 = vmatprep.mubr.bf16.mxu0 0
    %1275 = vmatmul.mubr.bf16.gmra.mxu0 %v1057
    %v1276 = vpop.f32.mrf.mxu0
    %v1277 = vadd.f32 %v1080, %v1276
    %v1278 = vpop.f32.mrf.mxu0
    %v1279 = vpop.f32.mrf.mxu0
    %v1280 = vadd.f32 %v1080, %v1279
    %v1281 = vpop.f32.mrf.mxu0
    %1282 = vmatprep.mubr.bf16.mxu0 0
    %1283 = vmatmul.mubr.bf16.gmra.mxu0 %v1058
    %v1284 = vpop.f32.mrf.mxu0
    %v1285 = vadd.f32 %v1080, %v1284
    %v1286 = vpop.f32.mrf.mxu0
    %v1287 = vpop.f32.mrf.mxu0
    %v1288 = vadd.f32 %v1080, %v1287
    %v1289 = vpop.f32.mrf.mxu0
    %1290 = vdwg.mxu0
    %v1291 = vtanh.pop %v1165
    %v1292 = vtanh.pop %v1168
    %v1293 = vtanh.pop %v1173
    %v1294 = vtanh.pop %v1176
    %v1295 = vtanh.pop %v1181
    %v1296 = vtanh.pop %v1184
    %v1297 = vtanh.pop %v1189
    %v1298 = vtanh.pop %v1192
    %v1299 = vtanh.pop %v1197
    %v1300 = vtanh.pop %v1200
    %v1301 = vtanh.pop %v1205
    %v1302 = vtanh.pop %v1208
    %v1303 = vtanh.pop %v1213
    %v1304 = vtanh.pop %v1216
    %v1305 = vtanh.pop %v1221
    %v1306 = vtanh.pop %v1224
    %v1307 = vtanh.pop %v1229
    %v1308 = vtanh.pop %v1232
    %v1309 = vtanh.pop %v1237
    %v1310 = vtanh.pop %v1240
    %v1311 = vtanh.pop %v1245
    %v1312 = vtanh.pop %v1248
    %v1313 = vtanh.pop %v1253
    %v1314 = vtanh.pop %v1256
    %v1315 = vtanh.pop %v1261
    %v1316 = vtanh.pop %v1264
    %v1317 = vtanh.pop %v1269
    %v1318 = vtanh.pop %v1272
    %v1319 = vtanh.pop %v1277
    %v1320 = vtanh.pop %v1280
    %v1321 = vtanh.pop %v1285
    %v1322 = vtanh.pop %v1288
    %1323 = vst [vmem:[#allocation8] sm:$0xff] %v1291
    %1324 = vst [vmem:[#allocation8 + $0x8] sm:$0xff] %v1292
    %1325 = vst [vmem:[#allocation8 + $0x10] sm:$0xff] %v1293
    %1326 = vst [vmem:[#allocation8 + $0x18] sm:$0xff] %v1294
    %1327 = vst [vmem:[#allocation8 + $0x20] sm:$0xff] %v1295
    %1328 = vst [vmem:[#allocation8 + $0x28] sm:$0xff] %v1296
    %1329 = vst [vmem:[#allocation8 + $0x30] sm:$0xff] %v1297
    %1330 = vst [vmem:[#allocation8 + $0x38] sm:$0xff] %v1298
    %1331 = vst [vmem:[#allocation8 + $0x40] sm:$0xff] %v1299
    %1332 = vst [vmem:[#allocation8 + $0x48] sm:$0xff] %v1300
    %1333 = vst [vmem:[#allocation8 + $0x50] sm:$0xff] %v1301
    %1334 = vst [vmem:[#allocation8 + $0x58] sm:$0xff] %v1302
    %1335 = vst [vmem:[#allocation8 + $0x60] sm:$0xff] %v1303
    %1336 = vst [vmem:[#allocation8 + $0x68] sm:$0xff] %v1304
    %1337 = vst [vmem:[#allocation8 + $0x70] sm:$0xff] %v1305
    %1338 = vst [vmem:[#allocation8 + $0x78] sm:$0xff] %v1306
    %1339 = vst [vmem:[#allocation8 + $0x80] sm:$0xff] %v1307
    %1340 = vst [vmem:[#allocation8 + $0x88] sm:$0xff] %v1308
    %1341 = vst [vmem:[#allocation8 + $0x90] sm:$0xff] %v1309
    %1342 = vst [vmem:[#allocation8 + $0x98] sm:$0xff] %v1310
    %1343 = vst [vmem:[#allocation8 + $0xa0] sm:$0xff] %v1311
    %1344 = vst [vmem:[#allocation8 + $0xa8] sm:$0xff] %v1312
    %1345 = vst [vmem:[#allocation8 + $0xb0] sm:$0xff] %v1313
    %1346 = vst [vmem:[#allocation8 + $0xb8] sm:$0xff] %v1314
    %1347 = vst [vmem:[#allocation8 + $0xc0] sm:$0xff] %v1315
    %1348 = vst [vmem:[#allocation8 + $0xc8] sm:$0xff] %v1316
    %1349 = vst [vmem:[#allocation8 + $0xd0] sm:$0xff] %v1317
    %1350 = vst [vmem:[#allocation8 + $0xd8] sm:$0xff] %v1318
    %1351 = vst [vmem:[#allocation8 + $0xe0] sm:$0xff] %v1319
    %1352 = vst [vmem:[#allocation8 + $0xe8] sm:$0xff] %v1320
    %1353 = vst [vmem:[#allocation8 + $0xf0] sm:$0xff] %v1321
    %1354 = vst [vmem:[#allocation8 + $0xf8] sm:$0xff] %v1322
    %v1355 = vpack.c.bf16 %v1292, %v1291
    %v1356 = vpack.c.bf16 %v1294, %v1293
    %v1357 = vpack.c.bf16 %v1296, %v1295
    %v1358 = vpack.c.bf16 %v1298, %v1297
    %v1359 = vpack.c.bf16 %v1300, %v1299
    %v1360 = vpack.c.bf16 %v1302, %v1301
    %v1361 = vpack.c.bf16 %v1304, %v1303
    %v1362 = vpack.c.bf16 %v1306, %v1305
    %v1363 = vpack.c.bf16 %v1308, %v1307
    %v1364 = vpack.c.bf16 %v1310, %v1309
    %v1365 = vpack.c.bf16 %v1312, %v1311
    %v1366 = vpack.c.bf16 %v1314, %v1313
    %v1367 = vpack.c.bf16 %v1316, %v1315
    %v1368 = vpack.c.bf16 %v1318, %v1317
    %v1369 = vpack.c.bf16 %v1320, %v1319
    %v1370 = vpack.c.bf16 %v1322, %v1321
    %v1387 = vunpack.c.l.b16 %v1355
    %v1388 = vunpack.c.h.b16 %v1355
    %v1389 = vunpack.c.l.b16 %v1356
    %v1390 = vunpack.c.h.b16 %v1356
    %v1391 = vunpack.c.l.b16 %v1357
    %v1392 = vunpack.c.h.b16 %v1357
    %v1393 = vunpack.c.l.b16 %v1358
    %v1394 = vunpack.c.h.b16 %v1358
    %v1395 = vunpack.c.l.b16 %v1359
    %v1396 = vunpack.c.h.b16 %v1359
    %v1397 = vunpack.c.l.b16 %v1360
    %v1398 = vunpack.c.h.b16 %v1360
    %v1399 = vunpack.c.l.b16 %v1361
    %v1400 = vunpack.c.h.b16 %v1361
    %v1401 = vunpack.c.l.b16 %v1362
    %v1402 = vunpack.c.h.b16 %v1362
    %v1403 = vunpack.c.l.b16 %v1363
    %v1404 = vunpack.c.h.b16 %v1363
    %v1405 = vunpack.c.l.b16 %v1364
    %v1406 = vunpack.c.h.b16 %v1364
    %v1407 = vunpack.c.l.b16 %v1365
    %v1408 = vunpack.c.h.b16 %v1365
    %v1409 = vunpack.c.l.b16 %v1366
    %v1410 = vunpack.c.h.b16 %v1366
    %v1411 = vunpack.c.l.b16 %v1367
    %v1412 = vunpack.c.h.b16 %v1367
    %v1413 = vunpack.c.l.b16 %v1368
    %v1414 = vunpack.c.h.b16 %v1368
    %v1415 = vunpack.c.l.b16 %v1369
    %v1416 = vunpack.c.h.b16 %v1369
    %v1417 = vunpack.c.l.b16 %v1370
    %v1418 = vunpack.c.h.b16 %v1370
    %v1419 = vpack.c.b16 %v1387, %v1387
    %v1420 = vpack.c.b16 %v1388, %v1388
    %v1421 = vpack.c.b16 %v1389, %v1389
    %v1422 = vpack.c.b16 %v1390, %v1390
    %v1423 = vpack.c.b16 %v1391, %v1391
    %v1424 = vpack.c.b16 %v1392, %v1392
    %v1425 = vpack.c.b16 %v1393, %v1393
    %v1426 = vpack.c.b16 %v1394, %v1394
    %v1427 = vpack.c.b16 %v1395, %v1395
    %v1428 = vpack.c.b16 %v1396, %v1396
    %v1429 = vpack.c.b16 %v1397, %v1397
    %v1430 = vpack.c.b16 %v1398, %v1398
    %v1431 = vpack.c.b16 %v1399, %v1399
    %v1432 = vpack.c.b16 %v1400, %v1400
    %v1433 = vpack.c.b16 %v1401, %v1401
    %v1434 = vpack.c.b16 %v1402, %v1402
    %v1435 = vpack.c.b16 %v1403, %v1403
    %v1436 = vpack.c.b16 %v1404, %v1404
    %v1437 = vpack.c.b16 %v1405, %v1405
    %v1438 = vpack.c.b16 %v1406, %v1406
    %v1439 = vpack.c.b16 %v1407, %v1407
    %v1440 = vpack.c.b16 %v1408, %v1408
    %v1441 = vpack.c.b16 %v1409, %v1409
    %v1442 = vpack.c.b16 %v1410, %v1410
    %v1443 = vpack.c.b16 %v1411, %v1411
    %v1444 = vpack.c.b16 %v1412, %v1412
    %v1445 = vpack.c.b16 %v1413, %v1413
    %v1446 = vpack.c.b16 %v1414, %v1414
    %v1447 = vpack.c.b16 %v1415, %v1415
    %v1448 = vpack.c.b16 %v1416, %v1416
    %v1449 = vpack.c.b16 %v1417, %v1417
    %v1450 = vpack.c.b16 %v1418, %v1418
    %1483 = vst [vmem:[#allocation9] sm:$0xf] %v1419
    %1484 = vst [vmem:[#allocation9 + $0x4] sm:$0xf] %v1420
    %1485 = vst [vmem:[#allocation9 + $0x8] sm:$0xf] %v1421
    %1486 = vst [vmem:[#allocation9 + $0xc] sm:$0xf] %v1422
    %1487 = vst [vmem:[#allocation9 + $0x10] sm:$0xf] %v1423
    %1488 = vst [vmem:[#allocation9 + $0x14] sm:$0xf] %v1424
    %1489 = vst [vmem:[#allocation9 + $0x18] sm:$0xf] %v1425
    %1490 = vst [vmem:[#allocation9 + $0x1c] sm:$0xf] %v1426
    %1491 = vst [vmem:[#allocation9 + $0x20] sm:$0xf] %v1427
    %1492 = vst [vmem:[#allocation9 + $0x24] sm:$0xf] %v1428
    %1493 = vst [vmem:[#allocation9 + $0x28] sm:$0xf] %v1429
    %1494 = vst [vmem:[#allocation9 + $0x2c] sm:$0xf] %v1430
    %1495 = vst [vmem:[#allocation9 + $0x30] sm:$0xf] %v1431
    %1496 = vst [vmem:[#allocation9 + $0x34] sm:$0xf] %v1432
    %1497 = vst [vmem:[#allocation9 + $0x38] sm:$0xf] %v1433
    %1498 = vst [vmem:[#allocation9 + $0x3c] sm:$0xf] %v1434
    %1499 = vst [vmem:[#allocation9 + $0x40] sm:$0xf] %v1435
    %1500 = vst [vmem:[#allocation9 + $0x44] sm:$0xf] %v1436
    %1501 = vst [vmem:[#allocation9 + $0x48] sm:$0xf] %v1437
    %1502 = vst [vmem:[#allocation9 + $0x4c] sm:$0xf] %v1438
    %1503 = vst [vmem:[#allocation9 + $0x50] sm:$0xf] %v1439
    %1504 = vst [vmem:[#allocation9 + $0x54] sm:$0xf] %v1440
    %1505 = vst [vmem:[#allocation9 + $0x58] sm:$0xf] %v1441
    %1506 = vst [vmem:[#allocation9 + $0x5c] sm:$0xf] %v1442
    %1507 = vst [vmem:[#allocation9 + $0x60] sm:$0xf] %v1443
    %1508 = vst [vmem:[#allocation9 + $0x64] sm:$0xf] %v1444
    %1509 = vst [vmem:[#allocation9 + $0x68] sm:$0xf] %v1445
    %1510 = vst [vmem:[#allocation9 + $0x6c] sm:$0xf] %v1446
    %1511 = vst [vmem:[#allocation9 + $0x70] sm:$0xf] %v1447
    %1512 = vst [vmem:[#allocation9 + $0x74] sm:$0xf] %v1448
    %1513 = vst [vmem:[#allocation9 + $0x78] sm:$0xf] %v1449
    %1514 = vst [vmem:[#allocation9 + $0x7c] sm:$0xf] %v1450
    // Predicated region
    $region30: #{tpu_custom_call.1} parent=1 // pred_check
      _
    $region31: #{tpu_custom_call.1} parent=1 // pred_check_branch
      %1516 = sbr.rel (0) target = $region33
    $region32: #{tpu_custom_call.1} parent=1 // pred_region
      %s1518 = ssub.s32 4096, 4096
      %1519 = vsyncadd [#allocation4], %s1518
      %s1520 = sshll.u32 [#allocation8], 4
      %s1521 = int_to_ptr.vmem [resolvable:$true] %s1520
      %1526 = dma.vmem_to_hbm [thread:$0]  %s1521, 4096, %s4, [#allocation4], 128, 128, 8
    $region33: #{tpu_custom_call.1} parent=1 // pred_fallthru
      _
    // Predicated region
    $region34: #{tpu_custom_call.1} parent=1 // pred_check
      _
    $region35: #{tpu_custom_call.1} parent=1 // pred_check_branch
      %1528 = sbr.rel (0) target = $region37
    $region36: #{tpu_custom_call.1} parent=1 // pred_region
      %s1530 = ssub.s32 2048, 2048
      %1531 = vsyncadd [#allocation10], %s1530
      %s1532 = sshll.u32 [#allocation9], 4
      %s1533 = int_to_ptr.vmem [resolvable:$true] %s1532
      %1538 = dma.vmem_to_hbm [thread:$0]  %s1533, 2048, %s5, [#allocation10], 64, 64, 4
    $region37: #{tpu_custom_call.1} parent=1 // pred_fallthru
      _
    // Predicated region
    $region38: #{tpu_custom_call.1} parent=1 // pred_check
      _
    $region39: #{tpu_custom_call.1} parent=1 // pred_check_branch
      %1540 = sbr.rel (0) target = $region41
    $region40: #{tpu_custom_call.1} parent=1 // pred_region
      %1541 = dma.done [#allocation4], 4096
    $region41: #{tpu_custom_call.1} parent=1 // pred_fallthru
      _
    // Predicated region
    $region42: #{tpu_custom_call.1} parent=1 // pred_check
      _
    $region43: #{tpu_custom_call.1} parent=1 // pred_check_branch
      %1543 = sbr.rel (0) target = $region45
    $region44: #{tpu_custom_call.1} parent=1 // pred_region
      %1544 = dma.done [#allocation10], 2048
    $region45: #{tpu_custom_call.1} parent=1 // pred_fallthru
      _
    %1545 = vsyncpa [#allocation3], 1
    %1546 = vsyncpa [#allocation6], 1
    %1547 = vsyncpa [#allocation4], 1
    %1548 = vsyncpa [#allocation10], 1

</llo_original>
